<compile_context>
chip_gen: v5e
topology: v5e:2x2
jax: 0.10.0
libtpu: 0.0.40
codegen_flags: <defaults>
</compile_context>

<pallas_src>
import jax
import jax.numpy as jnp
import numpy as np
from jax.experimental import pallas as pl
from jax.experimental.pallas import tpu as pltpu


# --------------------------------------------------------------------------
# Pallas kernel
# --------------------------------------------------------------------------
def s2vt_kernel(vf_ref, cap_ref,
                w1_ref, b1_ref,
                wih1_ref, whh1_ref, bg1_ref,
                wih2h_ref, wih2c_ref, whh2_ref, bg2_ref,
                w2_ref, b2_ref,
                out_ref,
                xg1_ref, xg2c_ref, h2hist_ref,
                h1_ref, c1_ref, h2_ref, c2_ref):
    T_total, Bt, F = vf_ref.shape
    Hp = h1_ref.shape[-1]
    G4 = 4 * Hp
    L1 = out_ref.shape[0]            # max_caption_length - 1
    T_vid = T_total - L1
    Vp = out_ref.shape[-1]

    # ---------- phase 1: hoisted, MXU-friendly big-M matmuls ----------
    # xg1[t] = (vf[t] @ W1 + b1) @ Wih1 + bg1 for all T_total steps at once.
    vf_flat = vf_ref[...].reshape(T_total * Bt, F)
    x1 = jnp.dot(vf_flat, w1_ref[...],
                 preferred_element_type=jnp.float32) + b1_ref[...]
    xg1 = jnp.dot(x1, wih1_ref[...],
                  preferred_element_type=jnp.float32) + bg1_ref[...]
    xg1_ref[...] = xg1.reshape(T_total, Bt, G4)

    # Caption-path input projection only for the last L1 steps (it is exactly
    # zero before that, so those T_vid matmuls are skipped entirely).
    cap_flat = cap_ref[...].reshape(L1 * Bt, Hp)
    xg2c = jnp.dot(cap_flat, wih2c_ref[...],
                   preferred_element_type=jnp.float32)
    xg2c_ref[...] = xg2c.reshape(L1, Bt, G4)

    # Hoisted bias broadcast for LSTM2 (bg1/b1 already folded into xg1).
    bg2_b = jnp.broadcast_to(bg2_ref[...], (Bt, G4))

    # Zero initial LSTM states (PyTorch default h0 = c0 = 0).
    zeros_bh = jnp.zeros((Bt, Hp), jnp.float32)
    h1_ref[...] = zeros_bh
    c1_ref[...] = zeros_bh
    h2_ref[...] = zeros_bh
    c2_ref[...] = zeros_bh

    def gate_math(gates, c):
        # PyTorch LSTM gate order along 4H: input, forget, cell(g), output.
        # Hp is a multiple of 128, so every gate slice is lane-aligned.
        i = jax.nn.sigmoid(gates[:, 0:Hp])
        f = jax.nn.sigmoid(gates[:, Hp:2 * Hp])
        g = jnp.tanh(gates[:, 2 * Hp:3 * Hp])
        o = jax.nn.sigmoid(gates[:, 3 * Hp:4 * Hp])
        c_new = f * c + i * g
        h_new = o * jnp.tanh(c_new)
        return h_new, c_new

    def step(t, xg2_extra):
        # Only the recurrent matmuls live on the serial critical path.
        g1 = xg1_ref[t] + jnp.dot(h1_ref[...], whh1_ref[...],
                                  preferred_element_type=jnp.float32)
        h1, c1 = gate_math(g1, c1_ref[...])
        h1_ref[...] = h1
        c1_ref[...] = c1

        # h2 @ Whh2 has no dependence on h1, so it can overlap with the
        # LSTM1 gate math above.
        g2 = (jnp.dot(h1, wih2h_ref[...], preferred_element_type=jnp.float32)
              + jnp.dot(h2_ref[...], whh2_ref[...],
                        preferred_element_type=jnp.float32)
              + bg2_b + xg2_extra)
        h2, c2 = gate_math(g2, c2_ref[...])
        h2_ref[...] = h2
        c2_ref[...] = c2
        return h2

    # ---------- phase 2a: encoder steps (caption input zero, no output) ----------
    @pl.loop(0, T_vid)
    def _(t):
        step(t, 0.0)

    # ---------- phase 2b: decoder steps (caption input, record h2) ----------
    @pl.loop(0, L1)
    def _(d):
        h2 = step(T_vid + d, xg2c_ref[d])
        h2hist_ref[d] = h2

    # ---------- phase 3: hoisted output projection (linear2) ----------
    h2_flat = h2hist_ref[...].reshape(L1 * Bt, Hp)
    logits = jnp.dot(h2_flat, w2_ref[...],
                     preferred_element_type=jnp.float32) + b2_ref[...]
    out_ref[...] = logits.reshape(L1, Bt, Vp)


# --------------------------------------------------------------------------
# Wrapper: padding to TPU-friendly shapes + pallas_call
# --------------------------------------------------------------------------
def _round_up(x, m):
    return ((x + m - 1) // m) * m


def _pad_axis(x, axis, new_size):
    pad = int(new_size) - x.shape[axis]
    if pad <= 0:
        return x
    cfg = [(0, 0)] * x.ndim
    cfg[axis] = (0, pad)
    return jnp.pad(x, cfg)


def _pad_gates(w, H, Hp):
    """Pad a [..., 4*H] PyTorch-LSTM weight/bias (gate order i|f|g|o) to [..., 4*Hp]."""
    w = w.astype(jnp.float32)
    lead = w.shape[:-1]
    w4 = w.reshape(*lead, 4, H)
    w4 = _pad_axis(w4, w4.ndim - 1, Hp)
    return w4.reshape(*lead, 4 * Hp)


def s2vt_forward(video_feats, captions, p, max_caption_length, *, block_b=8):
    """Pallas-backed S2VT forward (teacher-forcing branch). Returns [B, L-1, V]."""
    B, T_vid, F = video_feats.shape
    H = p["w1"].shape[1]
    V = p["w2"].shape[1]
    L1 = max_caption_length - 1
    T_total = T_vid + L1

    # Lane/sublane-aligned padded sizes (zero padding preserves the math).
    Hp = _round_up(H, 128)
    Vp = _round_up(V, 128)
    Bp = _round_up(max(B, block_b), block_b)
    G4 = 4 * Hp
    n_b = Bp // block_b

    # ---- pad weights once; split wih2 into its h1-part / caption-part ----
    w1 = _pad_axis(p["w1"].astype(jnp.float32), 1, Hp)                    # [F, Hp]
    b1 = _pad_axis(p["b1"].astype(jnp.float32), 1, Hp)                    # [1, Hp]
    wih1 = _pad_axis(_pad_gates(p["wih1"], H, Hp), 0, Hp)                 # [Hp, 4Hp]
    whh1 = _pad_axis(_pad_gates(p["whh1"], H, Hp), 0, Hp)                 # [Hp, 4Hp]
    bg1 = _pad_gates(p["bg1"], H, Hp)                                     # [1, 4Hp]
    wih2h = _pad_axis(_pad_gates(p["wih2"][:H], H, Hp), 0, Hp)            # [Hp, 4Hp]
    wih2c = _pad_axis(_pad_gates(p["wih2"][H:], H, Hp), 0, Hp)            # [Hp, 4Hp]
    whh2 = _pad_axis(_pad_gates(p["whh2"], H, Hp), 0, Hp)                 # [Hp, 4Hp]
    bg2 = _pad_gates(p["bg2"], H, Hp)                                     # [1, 4Hp]
    w2 = _pad_axis(_pad_axis(p["w2"].astype(jnp.float32), 0, Hp), 1, Vp)  # [Hp, Vp]
    b2 = _pad_axis(p["b2"].astype(jnp.float32), 1, Vp)                    # [1, Vp]

    # ---- data prep: time padding, caption embedding, batch padding, time-major ----
    vf = _pad_axis(video_feats.astype(jnp.float32), 0, Bp)                # [Bp, T_vid, F]
    vf_pad = jnp.concatenate([vf, jnp.zeros((Bp, L1, F), jnp.float32)], axis=1)
    vf_tm = jnp.transpose(vf_pad, (1, 0, 2))                              # [T_total, Bp, F]

    cap_emb = p["embedding"][captions[:, :L1]].astype(jnp.float32)        # [B, L1, H]
    cap_emb = _pad_axis(_pad_axis(cap_emb, 2, Hp), 0, Bp)                 # [Bp, L1, Hp]
    cap_tm = jnp.transpose(cap_emb, (1, 0, 2))                            # [L1, Bp, Hp]

    # ---- specs: batch grid axis (megacore "parallel"), weights full-resident ----
    def batch_spec(t_dim, f_dim):
        return pl.BlockSpec((t_dim, block_b, f_dim), lambda b: (0, b, 0))

    def full_spec(arr):
        nd = arr.ndim
        return pl.BlockSpec(arr.shape, lambda b, _nd=nd: (0,) * _nd)

    in_specs = [
        batch_spec(T_total, F),            # vf
        batch_spec(L1, Hp),                # caption embeddings (decoder steps only)
        full_spec(w1), full_spec(b1),
        full_spec(wih1), full_spec(whh1), full_spec(bg1),
        full_spec(wih2h), full_spec(wih2c), full_spec(whh2), full_spec(bg2),
        full_spec(w2), full_spec(b2),
    ]
    out_spec = pl.BlockSpec((L1, block_b, Vp), lambda b: (0, b, 0))

    out_tm = pl.pallas_call(
        s2vt_kernel,
        out_shape=jax.ShapeDtypeStruct((L1, Bp, Vp), jnp.float32),
        grid=(n_b,),
        in_specs=in_specs,
        out_specs=out_spec,
        scratch_shapes=[
            pltpu.VMEM((T_total, block_b, G4), jnp.float32),   # xg1 (hoisted LSTM1 inputs)
            pltpu.VMEM((L1, block_b, G4), jnp.float32),        # xg2 caption-path (decoder)
            pltpu.VMEM((L1, block_b, Hp), jnp.float32),        # h2 history for linear2
            pltpu.VMEM((block_b, Hp), jnp.float32),            # h1
            pltpu.VMEM((block_b, Hp), jnp.float32),            # c1
            pltpu.VMEM((block_b, Hp), jnp.float32),            # h2
            pltpu.VMEM((block_b, Hp), jnp.float32),            # c2
        ],
        compiler_params=pltpu.CompilerParams(
            dimension_semantics=("parallel",),     # batch tiles are independent
            vmem_limit_bytes=48 * 1024 * 1024,     # above the 16/32 MiB scoped defaults
        ),
    )(vf_tm, cap_tm, w1, b1, wih1, whh1, bg1, wih2h, wih2c, whh2, bg2, w2, b2)

    out = jnp.transpose(out_tm, (1, 0, 2))                                 # [Bp, L1, Vp]
    return out[:B, :, :V]


# --------------------------------------------------------------------------
# Pure-JAX reference of the same forward pass (unpadded math)
# --------------------------------------------------------------------------
def s2vt_reference(video_feats, captions, p, max_caption_length):
    B, T_vid, F = video_feats.shape
    H = p["w1"].shape[1]
    L1 = max_caption_length - 1

    vf_pad = jnp.concatenate(
        [video_feats.astype(jnp.float32), jnp.zeros((B, L1, F), jnp.float32)], axis=1)
    x1 = vf_pad @ p["w1"] + p["b1"]                                        # [B, T, H]
    cap_emb = p["embedding"][captions[:, :L1]]
    cap_pad = jnp.concatenate([jnp.zeros((B, T_vid, H), jnp.float32), cap_emb], axis=1)

    def run_lstm(xseq, wih, whh, bg):
        T = xseq.shape[1]
        h = jnp.zeros((B, H), jnp.float32)
        c = jnp.zeros((B, H), jnp.float32)
        outs = []
        for t in range(T):
            gates = xseq[:, t] @ wih + h @ whh + bg
            i = jax.nn.sigmoid(gates[:, 0:H])
            f = jax.nn.sigmoid(gates[:, H:2 * H])
            g = jnp.tanh(gates[:, 2 * H:3 * H])
            o = jax.nn.sigmoid(gates[:, 3 * H:4 * H])
            c = f * c + i * g
            h = o * jnp.tanh(c)
            outs.append(h)
        return jnp.stack(outs, axis=1)

    h1 = run_lstm(x1, p["wih1"], p["whh1"], p["bg1"])
    x2 = jnp.concatenate([h1, cap_pad], axis=2)
    h2 = run_lstm(x2, p["wih2"], p["whh2"], p["bg2"])
    logits = h2 @ p["w2"] + p["b2"]
    return logits[:, -L1:, :]


def init_params(key, feature_dim, hidden_dim, vocab_size):
    """Deterministic synthetic parameter init (shapes match the nn.Module)."""
    ks = jax.random.split(key, 11)
    H, F, V = hidden_dim, feature_dim, vocab_size

    def u(k, shape, fan_in):
        bound = 1.0 / np.sqrt(fan_in)
        return jax.random.uniform(k, shape, jnp.float32, -bound, bound)

    return {
        # linear1: [F] -> [H]      (stored transposed: [F, H])
        "w1": u(ks[0], (F, H), F),
        "b1": u(ks[1], (1, H), F),
        # lstm1: input H, hidden H (wih: [H, 4H], whh: [H, 4H], bias = b_ih + b_hh)
        "wih1": u(ks[2], (H, 4 * H), H),
        "whh1": u(ks[3], (H, 4 * H), H),
        "bg1": u(ks[4], (1, 4 * H), H),
        # lstm2: input 2H, hidden H
        "wih2": u(ks[5], (2 * H, 4 * H), H),
        "whh2": u(ks[6], (H, 4 * H), H),
        "bg2": u(ks[7], (1, 4 * H), H),
        # linear2: [H] -> [V]
        "w2": u(ks[8], (H, V), H),
        "b2": u(ks[9], (1, V), H),
        # embedding: [V, H]
        "embedding": jax.random.normal(ks[10], (V, H), jnp.float32),
    }


if __name__ == "__main__":
    # small, forward-consistent shapes (non-multiples of 8/128 to exercise padding)
    B, T_vid, F, H, V = 2, 8, 64, 32, 100
    max_caption_length = 5

    key = jax.random.PRNGKey(0)
    k_p, k_v, k_c = jax.random.split(key, 3)

    params = init_params(k_p, F, H, V)
    video_feats = jax.random.normal(k_v, (B, T_vid, F), jnp.float32)
    captions = jax.random.randint(k_c, (B, max_caption_length), 0, V, jnp.int32)

    out = s2vt_forward(video_feats, captions, params, max_caption_length)
    out = jax.block_until_ready(out)

    ref = s2vt_reference(video_feats, captions, params, max_caption_length)
    ref = jax.block_until_ready(ref)

    assert out.shape == (B, max_caption_length - 1, V), out.shape
    np.testing.assert_allclose(np.asarray(out), np.asarray(ref), rtol=1e-4, atol=1e-4)
    print("KERNEL_OK")
</pallas_src>

<mosaic_0001>
module attributes {stable_mosaic.version = 11 : i64} {
  func.func @s2vt_kernel(%arg0: i32, %arg1: memref<12x8x64xf32, #tpu.memory_space<vmem>>, %arg2: memref<4x8x128xf32, #tpu.memory_space<vmem>>, %arg3: memref<64x128xf32, #tpu.memory_space<vmem>>, %arg4: memref<1x128xf32, #tpu.memory_space<vmem>>, %arg5: memref<128x512xf32, #tpu.memory_space<vmem>>, %arg6: memref<128x512xf32, #tpu.memory_space<vmem>>, %arg7: memref<1x512xf32, #tpu.memory_space<vmem>>, %arg8: memref<128x512xf32, #tpu.memory_space<vmem>>, %arg9: memref<128x512xf32, #tpu.memory_space<vmem>>, %arg10: memref<128x512xf32, #tpu.memory_space<vmem>>, %arg11: memref<1x512xf32, #tpu.memory_space<vmem>>, %arg12: memref<128x128xf32, #tpu.memory_space<vmem>>, %arg13: memref<1x128xf32, #tpu.memory_space<vmem>>, %arg14: memref<4x8x128xf32, #tpu.memory_space<vmem>>, %arg15: memref<12x8x512xf32, #tpu.memory_space<vmem>>, %arg16: memref<4x8x512xf32, #tpu.memory_space<vmem>>, %arg17: memref<4x8x128xf32, #tpu.memory_space<vmem>>, %arg18: memref<8x128xf32, #tpu.memory_space<vmem>>, %arg19: memref<8x128xf32, #tpu.memory_space<vmem>>, %arg20: memref<8x128xf32, #tpu.memory_space<vmem>>, %arg21: memref<8x128xf32, #tpu.memory_space<vmem>>) attributes {dimension_semantics = [#tpu.dimension_semantics<parallel>], iteration_bounds = array<i64: 1>, scalar_prefetch = 0 : i64, scratch_operands = 7 : i64, tpu.core_type = #tpu.core_type<tc>, window_params = [{transform_indices = @transform_0, window_bounds = array<i64: 12, 8, 64>}, {transform_indices = @transform_1, window_bounds = array<i64: 4, 8, 128>}, {pipeline_mode = #tpu.pipeline_mode<synchronous>, transform_indices = @transform_2, window_bounds = array<i64: 64, 128>}, {pipeline_mode = #tpu.pipeline_mode<synchronous>, transform_indices = @transform_3, window_bounds = array<i64: 1, 128>}, {pipeline_mode = #tpu.pipeline_mode<synchronous>, transform_indices = @transform_4, window_bounds = array<i64: 128, 512>}, {pipeline_mode = #tpu.pipeline_mode<synchronous>, transform_indices = @transform_5, window_bounds = array<i64: 128, 512>}, {pipeline_mode = #tpu.pipeline_mode<synchronous>, transform_indices = @transform_6, window_bounds = array<i64: 1, 512>}, {pipeline_mode = #tpu.pipeline_mode<synchronous>, transform_indices = @transform_7, window_bounds = array<i64: 128, 512>}, {pipeline_mode = #tpu.pipeline_mode<synchronous>, transform_indices = @transform_8, window_bounds = array<i64: 128, 512>}, {pipeline_mode = #tpu.pipeline_mode<synchronous>, transform_indices = @transform_9, window_bounds = array<i64: 128, 512>}, {pipeline_mode = #tpu.pipeline_mode<synchronous>, transform_indices = @transform_10, window_bounds = array<i64: 1, 512>}, {pipeline_mode = #tpu.pipeline_mode<synchronous>, transform_indices = @transform_11, window_bounds = array<i64: 128, 128>}, {pipeline_mode = #tpu.pipeline_mode<synchronous>, transform_indices = @transform_12, window_bounds = array<i64: 1, 128>}, {transform_indices = @transform_13, window_bounds = array<i64: 4, 8, 128>}]} {
    %c0 = arith.constant 0 : index
    %c0_0 = arith.constant 0 : index
    %c0_1 = arith.constant 0 : index
    %0 = vector.load %arg1[%c0, %c0_0, %c0_1] : memref<12x8x64xf32, #tpu.memory_space<vmem>>, vector<12x8x64xf32>
    %1 = vector.shape_cast %0 : vector<12x8x64xf32> to vector<96x64xf32>
    %c0_2 = arith.constant 0 : index
    %c0_3 = arith.constant 0 : index
    %2 = vector.load %arg3[%c0_2, %c0_3] : memref<64x128xf32, #tpu.memory_space<vmem>>, vector<64x128xf32>
    %cst = arith.constant dense<0.000000e+00> : vector<96x128xf32>
    %3 = tpu.matmul %1, %2, %cst {dimension_numbers = #tpu.dot_dimension_numbers<[1], [0], [0], [1], [0, 0, 1, 1], [], []>} : vector<96x64xf32>, vector<64x128xf32>, vector<96x128xf32> -> vector<96x128xf32>
    %c0_4 = arith.constant 0 : index
    %c0_5 = arith.constant 0 : index
    %4 = vector.load %arg4[%c0_4, %c0_5] : memref<1x128xf32, #tpu.memory_space<vmem>>, vector<1x128xf32>
    %5 = vector.broadcast %4 : vector<1x128xf32> to vector<96x128xf32>
    %6 = arith.addf %3, %5 : vector<96x128xf32>
    %c0_6 = arith.constant 0 : index
    %c0_7 = arith.constant 0 : index
    %7 = vector.load %arg5[%c0_6, %c0_7] : memref<128x512xf32, #tpu.memory_space<vmem>>, vector<128x512xf32>
    %cst_8 = arith.constant dense<0.000000e+00> : vector<96x512xf32>
    %8 = tpu.matmul %6, %7, %cst_8 {dimension_numbers = #tpu.dot_dimension_numbers<[1], [0], [0], [1], [0, 0, 1, 1], [], []>} : vector<96x128xf32>, vector<128x512xf32>, vector<96x512xf32> -> vector<96x512xf32>
    %c0_9 = arith.constant 0 : index
    %c0_10 = arith.constant 0 : index
    %9 = vector.load %arg7[%c0_9, %c0_10] : memref<1x512xf32, #tpu.memory_space<vmem>>, vector<1x512xf32>
    %10 = vector.broadcast %9 : vector<1x512xf32> to vector<96x512xf32>
    %11 = arith.addf %8, %10 : vector<96x512xf32>
    %12 = vector.shape_cast %11 : vector<96x512xf32> to vector<12x8x512xf32>
    %c0_11 = arith.constant 0 : index
    %c0_12 = arith.constant 0 : index
    %c0_13 = arith.constant 0 : index
    %13 = vector.load %arg15[%c0_11, %c0_12, %c0_13] : memref<12x8x512xf32, #tpu.memory_space<vmem>>, vector<12x8x512xf32>
    tpu.vector_store %arg15[%c0_11, %c0_12, %c0_13], %12 {strides = array<i32>} : memref<12x8x512xf32, #tpu.memory_space<vmem>>, vector<12x8x512xf32>,
    %c0_14 = arith.constant 0 : index
    %c0_15 = arith.constant 0 : index
    %c0_16 = arith.constant 0 : index
    %14 = vector.load %arg2[%c0_14, %c0_15, %c0_16] : memref<4x8x128xf32, #tpu.memory_space<vmem>>, vector<4x8x128xf32>
    %15 = vector.shape_cast %14 : vector<4x8x128xf32> to vector<32x128xf32>
    %c0_17 = arith.constant 0 : index
    %c0_18 = arith.constant 0 : index
    %16 = vector.load %arg9[%c0_17, %c0_18] : memref<128x512xf32, #tpu.memory_space<vmem>>, vector<128x512xf32>
    %cst_19 = arith.constant dense<0.000000e+00> : vector<32x512xf32>
    %17 = tpu.matmul %15, %16, %cst_19 {dimension_numbers = #tpu.dot_dimension_numbers<[1], [0], [0], [1], [0, 0, 1, 1], [], []>} : vector<32x128xf32>, vector<128x512xf32>, vector<32x512xf32> -> vector<32x512xf32>
    %18 = vector.shape_cast %17 : vector<32x512xf32> to vector<4x8x512xf32>
    %c0_20 = arith.constant 0 : index
    %c0_21 = arith.constant 0 : index
    %c0_22 = arith.constant 0 : index
    %19 = vector.load %arg16[%c0_20, %c0_21, %c0_22] : memref<4x8x512xf32, #tpu.memory_space<vmem>>, vector<4x8x512xf32>
    tpu.vector_store %arg16[%c0_20, %c0_21, %c0_22], %18 {strides = array<i32>} : memref<4x8x512xf32, #tpu.memory_space<vmem>>, vector<4x8x512xf32>,
    %c0_23 = arith.constant 0 : index
    %c0_24 = arith.constant 0 : index
    %20 = vector.load %arg11[%c0_23, %c0_24] : memref<1x512xf32, #tpu.memory_space<vmem>>, vector<1x512xf32>
    %21 = vector.shape_cast %20 : vector<1x512xf32> to vector<1x512xf32>
    %22 = vector.broadcast %21 : vector<1x512xf32> to vector<8x512xf32>
    %cst_25 = arith.constant 0.000000e+00 : f32
    %23 = vector.broadcast %cst_25 : f32 to vector<8x128xf32>
    %c0_26 = arith.constant 0 : index
    %c0_27 = arith.constant 0 : index
    %24 = vector.load %arg18[%c0_26, %c0_27] : memref<8x128xf32, #tpu.memory_space<vmem>>, vector<8x128xf32>
    tpu.vector_store %arg18[%c0_26, %c0_27], %23 {strides = array<i32>} : memref<8x128xf32, #tpu.memory_space<vmem>>, vector<8x128xf32>,
    %c0_28 = arith.constant 0 : index
    %c0_29 = arith.constant 0 : index
    %25 = vector.load %arg19[%c0_28, %c0_29] : memref<8x128xf32, #tpu.memory_space<vmem>>, vector<8x128xf32>
    tpu.vector_store %arg19[%c0_28, %c0_29], %23 {strides = array<i32>} : memref<8x128xf32, #tpu.memory_space<vmem>>, vector<8x128xf32>,
    %c0_30 = arith.constant 0 : index
    %c0_31 = arith.constant 0 : index
    %26 = vector.load %arg20[%c0_30, %c0_31] : memref<8x128xf32, #tpu.memory_space<vmem>>, vector<8x128xf32>
    tpu.vector_store %arg20[%c0_30, %c0_31], %23 {strides = array<i32>} : memref<8x128xf32, #tpu.memory_space<vmem>>, vector<8x128xf32>,
    %c0_32 = arith.constant 0 : index
    %c0_33 = arith.constant 0 : index
    %27 = vector.load %arg21[%c0_32, %c0_33] : memref<8x128xf32, #tpu.memory_space<vmem>>, vector<8x128xf32>
    tpu.vector_store %arg21[%c0_32, %c0_33], %23 {strides = array<i32>} : memref<8x128xf32, #tpu.memory_space<vmem>>, vector<8x128xf32>,
    %c0_i32 = arith.constant 0 : i32
    %c8_i32 = arith.constant 8 : i32
    %28 = arith.addi %c0_i32, %c8_i32 : i32
    %c1_i32 = arith.constant 1 : i32
    scf.for %arg22 = %c0_i32 to %28 step %c1_i32  : i32 {
      %c1_i32_49 = arith.constant 1 : i32
      %39 = arith.muli %arg22, %c1_i32_49 : i32
      %c0_i32_50 = arith.constant 0 : i32
      %40 = arith.addi %c0_i32_50, %39 : i32
      %41 = arith.index_cast %40 : i32 to index
      %c0_51 = arith.constant 0 : index
      %c0_52 = arith.constant 0 : index
      %42 = vector.load %arg15[%41, %c0_51, %c0_52] : memref<12x8x512xf32, #tpu.memory_space<vmem>>, vector<1x8x512xf32>
      %43 = vector.shape_cast %42 : vector<1x8x512xf32> to vector<8x512xf32>
      %c0_53 = arith.constant 0 : index
      %c0_54 = arith.constant 0 : index
      %44 = vector.load %arg18[%c0_53, %c0_54] : memref<8x128xf32, #tpu.memory_space<vmem>>, vector<8x128xf32>
      %c0_55 = arith.constant 0 : index
      %c0_56 = arith.constant 0 : index
      %45 = vector.load %arg6[%c0_55, %c0_56] : memref<128x512xf32, #tpu.memory_space<vmem>>, vector<128x512xf32>
      %cst_57 = arith.constant dense<0.000000e+00> : vector<8x512xf32>
      %46 = tpu.matmul %44, %45, %cst_57 {dimension_numbers = #tpu.dot_dimension_numbers<[1], [0], [0], [1], [0, 0, 1, 1], [], []>} : vector<8x128xf32>, vector<128x512xf32>, vector<8x512xf32> -> vector<8x512xf32>
      %47 = arith.addf %43, %46 : vector<8x512xf32>
      %c0_58 = arith.constant 0 : index
      %c0_59 = arith.constant 0 : index
      %48 = vector.load %arg19[%c0_58, %c0_59] : memref<8x128xf32, #tpu.memory_space<vmem>>, vector<8x128xf32>
      %49 = vector.extract_strided_slice %47 {offsets = [0, 0], sizes = [8, 128], strides = [1, 1]} : vector<8x512xf32> to vector<8x128xf32>
      %50 = arith.negf %49 : vector<8x128xf32>
      %51 = math.exp %50 : vector<8x128xf32>
      %cst_60 = arith.constant 1.000000e+00 : f32
      %52 = vector.broadcast %cst_60 : f32 to vector<8x128xf32>
      %53 = arith.addf %52, %51 : vector<8x128xf32>
      %54 = arith.divf %52, %53 : vector<8x128xf32>
      %55 = vector.extract_strided_slice %47 {offsets = [0, 128], sizes = [8, 128], strides = [1, 1]} : vector<8x512xf32> to vector<8x128xf32>
      %56 = arith.negf %55 : vector<8x128xf32>
      %57 = math.exp %56 : vector<8x128xf32>
      %cst_61 = arith.constant 1.000000e+00 : f32
      %58 = vector.broadcast %cst_61 : f32 to vector<8x128xf32>
      %59 = arith.addf %58, %57 : vector<8x128xf32>
      %60 = arith.divf %58, %59 : vector<8x128xf32>
      %61 = vector.extract_strided_slice %47 {offsets = [0, 256], sizes = [8, 128], strides = [1, 1]} : vector<8x512xf32> to vector<8x128xf32>
      %62 = math.tanh %61 : vector<8x128xf32>
      %63 = vector.extract_strided_slice %47 {offsets = [0, 384], sizes = [8, 128], strides = [1, 1]} : vector<8x512xf32> to vector<8x128xf32>
      %64 = arith.negf %63 : vector<8x128xf32>
      %65 = math.exp %64 : vector<8x128xf32>
      %cst_62 = arith.constant 1.000000e+00 : f32
      %66 = vector.broadcast %cst_62 : f32 to vector<8x128xf32>
      %67 = arith.addf %66, %65 : vector<8x128xf32>
      %68 = arith.divf %66, %67 : vector<8x128xf32>
      %69 = arith.mulf %60, %48 : vector<8x128xf32>
      %70 = arith.mulf %54, %62 : vector<8x128xf32>
      %71 = arith.addf %69, %70 : vector<8x128xf32>
      %72 = math.tanh %71 : vector<8x128xf32>
      %73 = arith.mulf %68, %72 : vector<8x128xf32>
      %c0_63 = arith.constant 0 : index
      %c0_64 = arith.constant 0 : index
      %74 = vector.load %arg18[%c0_63, %c0_64] : memref<8x128xf32, #tpu.memory_space<vmem>>, vector<8x128xf32>
      tpu.vector_store %arg18[%c0_63, %c0_64], %73 {strides = array<i32>} : memref<8x128xf32, #tpu.memory_space<vmem>>, vector<8x128xf32>,
      %c0_65 = arith.constant 0 : index
      %c0_66 = arith.constant 0 : index
      %75 = vector.load %arg19[%c0_65, %c0_66] : memref<8x128xf32, #tpu.memory_space<vmem>>, vector<8x128xf32>
      tpu.vector_store %arg19[%c0_65, %c0_66], %71 {strides = array<i32>} : memref<8x128xf32, #tpu.memory_space<vmem>>, vector<8x128xf32>,
      %c0_67 = arith.constant 0 : index
      %c0_68 = arith.constant 0 : index
      %76 = vector.load %arg8[%c0_67, %c0_68] : memref<128x512xf32, #tpu.memory_space<vmem>>, vector<128x512xf32>
      %cst_69 = arith.constant dense<0.000000e+00> : vector<8x512xf32>
      %77 = tpu.matmul %73, %76, %cst_69 {dimension_numbers = #tpu.dot_dimension_numbers<[1], [0], [0], [1], [0, 0, 1, 1], [], []>} : vector<8x128xf32>, vector<128x512xf32>, vector<8x512xf32> -> vector<8x512xf32>
      %c0_70 = arith.constant 0 : index
      %c0_71 = arith.constant 0 : index
      %78 = vector.load %arg20[%c0_70, %c0_71] : memref<8x128xf32, #tpu.memory_space<vmem>>, vector<8x128xf32>
      %c0_72 = arith.constant 0 : index
      %c0_73 = arith.constant 0 : index
      %79 = vector.load %arg10[%c0_72, %c0_73] : memref<128x512xf32, #tpu.memory_space<vmem>>, vector<128x512xf32>
      %cst_74 = arith.constant dense<0.000000e+00> : vector<8x512xf32>
      %80 = tpu.matmul %78, %79, %cst_74 {dimension_numbers = #tpu.dot_dimension_numbers<[1], [0], [0], [1], [0, 0, 1, 1], [], []>} : vector<8x128xf32>, vector<128x512xf32>, vector<8x512xf32> -> vector<8x512xf32>
      %81 = arith.addf %77, %80 : vector<8x512xf32>
      %82 = arith.addf %81, %22 : vector<8x512xf32>
      %cst_75 = arith.constant 0.000000e+00 : f32
      %83 = vector.broadcast %cst_75 : f32 to vector<8x512xf32>
      %84 = arith.addf %82, %83 : vector<8x512xf32>
      %c0_76 = arith.constant 0 : index
      %c0_77 = arith.constant 0 : index
      %85 = vector.load %arg21[%c0_76, %c0_77] : memref<8x128xf32, #tpu.memory_space<vmem>>, vector<8x128xf32>
      %86 = vector.extract_strided_slice %84 {offsets = [0, 0], sizes = [8, 128], strides = [1, 1]} : vector<8x512xf32> to vector<8x128xf32>
      %87 = arith.negf %86 : vector<8x128xf32>
      %88 = math.exp %87 : vector<8x128xf32>
      %cst_78 = arith.constant 1.000000e+00 : f32
      %89 = vector.broadcast %cst_78 : f32 to vector<8x128xf32>
      %90 = arith.addf %89, %88 : vector<8x128xf32>
      %91 = arith.divf %89, %90 : vector<8x128xf32>
      %92 = vector.extract_strided_slice %84 {offsets = [0, 128], sizes = [8, 128], strides = [1, 1]} : vector<8x512xf32> to vector<8x128xf32>
      %93 = arith.negf %92 : vector<8x128xf32>
      %94 = math.exp %93 : vector<8x128xf32>
      %cst_79 = arith.constant 1.000000e+00 : f32
      %95 = vector.broadcast %cst_79 : f32 to vector<8x128xf32>
      %96 = arith.addf %95, %94 : vector<8x128xf32>
      %97 = arith.divf %95, %96 : vector<8x128xf32>
      %98 = vector.extract_strided_slice %84 {offsets = [0, 256], sizes = [8, 128], strides = [1, 1]} : vector<8x512xf32> to vector<8x128xf32>
      %99 = math.tanh %98 : vector<8x128xf32>
      %100 = vector.extract_strided_slice %84 {offsets = [0, 384], sizes = [8, 128], strides = [1, 1]} : vector<8x512xf32> to vector<8x128xf32>
      %101 = arith.negf %100 : vector<8x128xf32>
      %102 = math.exp %101 : vector<8x128xf32>
      %cst_80 = arith.constant 1.000000e+00 : f32
      %103 = vector.broadcast %cst_80 : f32 to vector<8x128xf32>
      %104 = arith.addf %103, %102 : vector<8x128xf32>
      %105 = arith.divf %103, %104 : vector<8x128xf32>
      %106 = arith.mulf %97, %85 : vector<8x128xf32>
      %107 = arith.mulf %91, %99 : vector<8x128xf32>
      %108 = arith.addf %106, %107 : vector<8x128xf32>
      %109 = math.tanh %108 : vector<8x128xf32>
      %110 = arith.mulf %105, %109 : vector<8x128xf32>
      %c0_81 = arith.constant 0 : index
      %c0_82 = arith.constant 0 : index
      %111 = vector.load %arg20[%c0_81, %c0_82] : memref<8x128xf32, #tpu.memory_space<vmem>>, vector<8x128xf32>
      tpu.vector_store %arg20[%c0_81, %c0_82], %110 {strides = array<i32>} : memref<8x128xf32, #tpu.memory_space<vmem>>, vector<8x128xf32>,
      %c0_83 = arith.constant 0 : index
      %c0_84 = arith.constant 0 : index
      %112 = vector.load %arg21[%c0_83, %c0_84] : memref<8x128xf32, #tpu.memory_space<vmem>>, vector<8x128xf32>
      tpu.vector_store %arg21[%c0_83, %c0_84], %108 {strides = array<i32>} : memref<8x128xf32, #tpu.memory_space<vmem>>, vector<8x128xf32>,
    }
    %c8_i32_34 = arith.constant 8 : i32
    %c0_i32_35 = arith.constant 0 : i32
    %c4_i32 = arith.constant 4 : i32
    %29 = arith.addi %c0_i32_35, %c4_i32 : i32
    %c1_i32_36 = arith.constant 1 : i32
    scf.for %arg22 = %c0_i32_35 to %29 step %c1_i32_36  : i32 {
      %c1_i32_49 = arith.constant 1 : i32
      %39 = arith.muli %arg22, %c1_i32_49 : i32
      %c0_i32_50 = arith.constant 0 : i32
      %40 = arith.addi %c0_i32_50, %39 : i32
      %c8_i32_51 = arith.constant 8 : i32
      %41 = arith.addi %c8_i32_51, %40 : i32
      %42 = arith.index_cast %40 : i32 to index
      %c0_52 = arith.constant 0 : index
      %c0_53 = arith.constant 0 : index
      %43 = vector.load %arg16[%42, %c0_52, %c0_53] : memref<4x8x512xf32, #tpu.memory_space<vmem>>, vector<1x8x512xf32>
      %44 = vector.shape_cast %43 : vector<1x8x512xf32> to vector<8x512xf32>
      %45 = arith.index_cast %41 : i32 to index
      %c0_54 = arith.constant 0 : index
      %c0_55 = arith.constant 0 : index
      %46 = vector.load %arg15[%45, %c0_54, %c0_55] : memref<12x8x512xf32, #tpu.memory_space<vmem>>, vector<1x8x512xf32>
      %47 = vector.shape_cast %46 : vector<1x8x512xf32> to vector<8x512xf32>
      %c0_56 = arith.constant 0 : index
      %c0_57 = arith.constant 0 : index
      %48 = vector.load %arg18[%c0_56, %c0_57] : memref<8x128xf32, #tpu.memory_space<vmem>>, vector<8x128xf32>
      %c0_58 = arith.constant 0 : index
      %c0_59 = arith.constant 0 : index
      %49 = vector.load %arg6[%c0_58, %c0_59] : memref<128x512xf32, #tpu.memory_space<vmem>>, vector<128x512xf32>
      %cst_60 = arith.constant dense<0.000000e+00> : vector<8x512xf32>
      %50 = tpu.matmul %48, %49, %cst_60 {dimension_numbers = #tpu.dot_dimension_numbers<[1], [0], [0], [1], [0, 0, 1, 1], [], []>} : vector<8x128xf32>, vector<128x512xf32>, vector<8x512xf32> -> vector<8x512xf32>
      %51 = arith.addf %47, %50 : vector<8x512xf32>
      %c0_61 = arith.constant 0 : index
      %c0_62 = arith.constant 0 : index
      %52 = vector.load %arg19[%c0_61, %c0_62] : memref<8x128xf32, #tpu.memory_space<vmem>>, vector<8x128xf32>
      %53 = vector.extract_strided_slice %51 {offsets = [0, 0], sizes = [8, 128], strides = [1, 1]} : vector<8x512xf32> to vector<8x128xf32>
      %54 = arith.negf %53 : vector<8x128xf32>
      %55 = math.exp %54 : vector<8x128xf32>
      %cst_63 = arith.constant 1.000000e+00 : f32
      %56 = vector.broadcast %cst_63 : f32 to vector<8x128xf32>
      %57 = arith.addf %56, %55 : vector<8x128xf32>
      %58 = arith.divf %56, %57 : vector<8x128xf32>
      %59 = vector.extract_strided_slice %51 {offsets = [0, 128], sizes = [8, 128], strides = [1, 1]} : vector<8x512xf32> to vector<8x128xf32>
      %60 = arith.negf %59 : vector<8x128xf32>
      %61 = math.exp %60 : vector<8x128xf32>
      %cst_64 = arith.constant 1.000000e+00 : f32
      %62 = vector.broadcast %cst_64 : f32 to vector<8x128xf32>
      %63 = arith.addf %62, %61 : vector<8x128xf32>
      %64 = arith.divf %62, %63 : vector<8x128xf32>
      %65 = vector.extract_strided_slice %51 {offsets = [0, 256], sizes = [8, 128], strides = [1, 1]} : vector<8x512xf32> to vector<8x128xf32>
      %66 = math.tanh %65 : vector<8x128xf32>
      %67 = vector.extract_strided_slice %51 {offsets = [0, 384], sizes = [8, 128], strides = [1, 1]} : vector<8x512xf32> to vector<8x128xf32>
      %68 = arith.negf %67 : vector<8x128xf32>
      %69 = math.exp %68 : vector<8x128xf32>
      %cst_65 = arith.constant 1.000000e+00 : f32
      %70 = vector.broadcast %cst_65 : f32 to vector<8x128xf32>
      %71 = arith.addf %70, %69 : vector<8x128xf32>
      %72 = arith.divf %70, %71 : vector<8x128xf32>
      %73 = arith.mulf %64, %52 : vector<8x128xf32>
      %74 = arith.mulf %58, %66 : vector<8x128xf32>
      %75 = arith.addf %73, %74 : vector<8x128xf32>
      %76 = math.tanh %75 : vector<8x128xf32>
      %77 = arith.mulf %72, %76 : vector<8x128xf32>
      %c0_66 = arith.constant 0 : index
      %c0_67 = arith.constant 0 : index
      %78 = vector.load %arg18[%c0_66, %c0_67] : memref<8x128xf32, #tpu.memory_space<vmem>>, vector<8x128xf32>
      tpu.vector_store %arg18[%c0_66, %c0_67], %77 {strides = array<i32>} : memref<8x128xf32, #tpu.memory_space<vmem>>, vector<8x128xf32>,
      %c0_68 = arith.constant 0 : index
      %c0_69 = arith.constant 0 : index
      %79 = vector.load %arg19[%c0_68, %c0_69] : memref<8x128xf32, #tpu.memory_space<vmem>>, vector<8x128xf32>
      tpu.vector_store %arg19[%c0_68, %c0_69], %75 {strides = array<i32>} : memref<8x128xf32, #tpu.memory_space<vmem>>, vector<8x128xf32>,
      %c0_70 = arith.constant 0 : index
      %c0_71 = arith.constant 0 : index
      %80 = vector.load %arg8[%c0_70, %c0_71] : memref<128x512xf32, #tpu.memory_space<vmem>>, vector<128x512xf32>
      %cst_72 = arith.constant dense<0.000000e+00> : vector<8x512xf32>
      %81 = tpu.matmul %77, %80, %cst_72 {dimension_numbers = #tpu.dot_dimension_numbers<[1], [0], [0], [1], [0, 0, 1, 1], [], []>} : vector<8x128xf32>, vector<128x512xf32>, vector<8x512xf32> -> vector<8x512xf32>
      %c0_73 = arith.constant 0 : index
      %c0_74 = arith.constant 0 : index
      %82 = vector.load %arg20[%c0_73, %c0_74] : memref<8x128xf32, #tpu.memory_space<vmem>>, vector<8x128xf32>
      %c0_75 = arith.constant 0 : index
      %c0_76 = arith.constant 0 : index
      %83 = vector.load %arg10[%c0_75, %c0_76] : memref<128x512xf32, #tpu.memory_space<vmem>>, vector<128x512xf32>
      %cst_77 = arith.constant dense<0.000000e+00> : vector<8x512xf32>
      %84 = tpu.matmul %82, %83, %cst_77 {dimension_numbers = #tpu.dot_dimension_numbers<[1], [0], [0], [1], [0, 0, 1, 1], [], []>} : vector<8x128xf32>, vector<128x512xf32>, vector<8x512xf32> -> vector<8x512xf32>
      %85 = arith.addf %81, %84 : vector<8x512xf32>
      %86 = arith.addf %85, %22 : vector<8x512xf32>
      %87 = arith.addf %86, %44 : vector<8x512xf32>
      %c0_78 = arith.constant 0 : index
      %c0_79 = arith.constant 0 : index
      %88 = vector.load %arg21[%c0_78, %c0_79] : memref<8x128xf32, #tpu.memory_space<vmem>>, vector<8x128xf32>
      %89 = vector.extract_strided_slice %87 {offsets = [0, 0], sizes = [8, 128], strides = [1, 1]} : vector<8x512xf32> to vector<8x128xf32>
      %90 = arith.negf %89 : vector<8x128xf32>
      %91 = math.exp %90 : vector<8x128xf32>
      %cst_80 = arith.constant 1.000000e+00 : f32
      %92 = vector.broadcast %cst_80 : f32 to vector<8x128xf32>
      %93 = arith.addf %92, %91 : vector<8x128xf32>
      %94 = arith.divf %92, %93 : vector<8x128xf32>
      %95 = vector.extract_strided_slice %87 {offsets = [0, 128], sizes = [8, 128], strides = [1, 1]} : vector<8x512xf32> to vector<8x128xf32>
      %96 = arith.negf %95 : vector<8x128xf32>
      %97 = math.exp %96 : vector<8x128xf32>
      %cst_81 = arith.constant 1.000000e+00 : f32
      %98 = vector.broadcast %cst_81 : f32 to vector<8x128xf32>
      %99 = arith.addf %98, %97 : vector<8x128xf32>
      %100 = arith.divf %98, %99 : vector<8x128xf32>
      %101 = vector.extract_strided_slice %87 {offsets = [0, 256], sizes = [8, 128], strides = [1, 1]} : vector<8x512xf32> to vector<8x128xf32>
      %102 = math.tanh %101 : vector<8x128xf32>
      %103 = vector.extract_strided_slice %87 {offsets = [0, 384], sizes = [8, 128], strides = [1, 1]} : vector<8x512xf32> to vector<8x128xf32>
      %104 = arith.negf %103 : vector<8x128xf32>
      %105 = math.exp %104 : vector<8x128xf32>
      %cst_82 = arith.constant 1.000000e+00 : f32
      %106 = vector.broadcast %cst_82 : f32 to vector<8x128xf32>
      %107 = arith.addf %106, %105 : vector<8x128xf32>
      %108 = arith.divf %106, %107 : vector<8x128xf32>
      %109 = arith.mulf %100, %88 : vector<8x128xf32>
      %110 = arith.mulf %94, %102 : vector<8x128xf32>
      %111 = arith.addf %109, %110 : vector<8x128xf32>
      %112 = math.tanh %111 : vector<8x128xf32>
      %113 = arith.mulf %108, %112 : vector<8x128xf32>
      %c0_83 = arith.constant 0 : index
      %c0_84 = arith.constant 0 : index
      %114 = vector.load %arg20[%c0_83, %c0_84] : memref<8x128xf32, #tpu.memory_space<vmem>>, vector<8x128xf32>
      tpu.vector_store %arg20[%c0_83, %c0_84], %113 {strides = array<i32>} : memref<8x128xf32, #tpu.memory_space<vmem>>, vector<8x128xf32>,
      %c0_85 = arith.constant 0 : index
      %c0_86 = arith.constant 0 : index
      %115 = vector.load %arg21[%c0_85, %c0_86] : memref<8x128xf32, #tpu.memory_space<vmem>>, vector<8x128xf32>
      tpu.vector_store %arg21[%c0_85, %c0_86], %111 {strides = array<i32>} : memref<8x128xf32, #tpu.memory_space<vmem>>, vector<8x128xf32>,
      %116 = arith.index_cast %40 : i32 to index
      %c0_87 = arith.constant 0 : index
      %c0_88 = arith.constant 0 : index
      %117 = vector.load %arg17[%116, %c0_87, %c0_88] : memref<4x8x128xf32, #tpu.memory_space<vmem>>, vector<1x8x128xf32>
      %118 = vector.shape_cast %117 : vector<1x8x128xf32> to vector<8x128xf32>
      %119 = vector.shape_cast %113 : vector<8x128xf32> to vector<1x8x128xf32>
      tpu.vector_store %arg17[%116, %c0_87, %c0_88], %119 {strides = array<i32>} : memref<4x8x128xf32, #tpu.memory_space<vmem>>, vector<1x8x128xf32>,
    }
    %c4_i32_37 = arith.constant 4 : i32
    %c0_38 = arith.constant 0 : index
    %c0_39 = arith.constant 0 : index
    %c0_40 = arith.constant 0 : index
    %30 = vector.load %arg17[%c0_38, %c0_39, %c0_40] : memref<4x8x128xf32, #tpu.memory_space<vmem>>, vector<4x8x128xf32>
    %31 = vector.shape_cast %30 : vector<4x8x128xf32> to vector<32x128xf32>
    %c0_41 = arith.constant 0 : index
    %c0_42 = arith.constant 0 : index
    %32 = vector.load %arg12[%c0_41, %c0_42] : memref<128x128xf32, #tpu.memory_space<vmem>>, vector<128x128xf32>
    %cst_43 = arith.constant dense<0.000000e+00> : vector<32x128xf32>
    %33 = tpu.matmul %31, %32, %cst_43 {dimension_numbers = #tpu.dot_dimension_numbers<[1], [0], [0], [1], [0, 0, 1, 1], [], []>} : vector<32x128xf32>, vector<128x128xf32>, vector<32x128xf32> -> vector<32x128xf32>
    %c0_44 = arith.constant 0 : index
    %c0_45 = arith.constant 0 : index
    %34 = vector.load %arg13[%c0_44, %c0_45] : memref<1x128xf32, #tpu.memory_space<vmem>>, vector<1x128xf32>
    %35 = vector.broadcast %34 : vector<1x128xf32> to vector<32x128xf32>
    %36 = arith.addf %33, %35 : vector<32x128xf32>
    %37 = vector.shape_cast %36 : vector<32x128xf32> to vector<4x8x128xf32>
    %c0_46 = arith.constant 0 : index
    %c0_47 = arith.constant 0 : index
    %c0_48 = arith.constant 0 : index
    %38 = vector.load %arg14[%c0_46, %c0_47, %c0_48] : memref<4x8x128xf32, #tpu.memory_space<vmem>>, vector<4x8x128xf32>
    tpu.vector_store %arg14[%c0_46, %c0_47, %c0_48], %37 {strides = array<i32>} : memref<4x8x128xf32, #tpu.memory_space<vmem>>, vector<4x8x128xf32>,
    return
  }
  func.func @transform_0(%arg0: i32) -> (i32, i32, i32) {
    %c0_i32 = arith.constant 0 : i32
    %c0_i32_0 = arith.constant 0 : i32
    %c0_i32_1 = arith.constant 0 : i32
    return %c0_i32, %arg0, %c0_i32_0 : i32, i32, i32
  }
  func.func @transform_1(%arg0: i32) -> (i32, i32, i32) {
    %c0_i32 = arith.constant 0 : i32
    %c0_i32_0 = arith.constant 0 : i32
    %c0_i32_1 = arith.constant 0 : i32
    return %c0_i32, %arg0, %c0_i32_0 : i32, i32, i32
  }
  func.func @transform_2(%arg0: i32) -> (i32, i32) {
    %c0_i32 = arith.constant 0 : i32
    %c0_i32_0 = arith.constant 0 : i32
    %c0_i32_1 = arith.constant 0 : i32
    return %c0_i32, %c0_i32_0 : i32, i32
  }
  func.func @transform_3(%arg0: i32) -> (i32, i32) {
    %c0_i32 = arith.constant 0 : i32
    %c0_i32_0 = arith.constant 0 : i32
    %c0_i32_1 = arith.constant 0 : i32
    return %c0_i32, %c0_i32_0 : i32, i32
  }
  func.func @transform_4(%arg0: i32) -> (i32, i32) {
    %c0_i32 = arith.constant 0 : i32
    %c0_i32_0 = arith.constant 0 : i32
    %c0_i32_1 = arith.constant 0 : i32
    return %c0_i32, %c0_i32_0 : i32, i32
  }
  func.func @transform_5(%arg0: i32) -> (i32, i32) {
    %c0_i32 = arith.constant 0 : i32
    %c0_i32_0 = arith.constant 0 : i32
    %c0_i32_1 = arith.constant 0 : i32
    return %c0_i32, %c0_i32_0 : i32, i32
  }
  func.func @transform_6(%arg0: i32) -> (i32, i32) {
    %c0_i32 = arith.constant 0 : i32
    %c0_i32_0 = arith.constant 0 : i32
    %c0_i32_1 = arith.constant 0 : i32
    return %c0_i32, %c0_i32_0 : i32, i32
  }
  func.func @transform_7(%arg0: i32) -> (i32, i32) {
    %c0_i32 = arith.constant 0 : i32
    %c0_i32_0 = arith.constant 0 : i32
    %c0_i32_1 = arith.constant 0 : i32
    return %c0_i32, %c0_i32_0 : i32, i32
  }
  func.func @transform_8(%arg0: i32) -> (i32, i32) {
    %c0_i32 = arith.constant 0 : i32
    %c0_i32_0 = arith.constant 0 : i32
    %c0_i32_1 = arith.constant 0 : i32
    return %c0_i32, %c0_i32_0 : i32, i32
  }
  func.func @transform_9(%arg0: i32) -> (i32, i32) {
    %c0_i32 = arith.constant 0 : i32
    %c0_i32_0 = arith.constant 0 : i32
    %c0_i32_1 = arith.constant 0 : i32
    return %c0_i32, %c0_i32_0 : i32, i32
  }
  func.func @transform_10(%arg0: i32) -> (i32, i32) {
    %c0_i32 = arith.constant 0 : i32
    %c0_i32_0 = arith.constant 0 : i32
    %c0_i32_1 = arith.constant 0 : i32
    return %c0_i32, %c0_i32_0 : i32, i32
  }
  func.func @transform_11(%arg0: i32) -> (i32, i32) {
    %c0_i32 = arith.constant 0 : i32
    %c0_i32_0 = arith.constant 0 : i32
    %c0_i32_1 = arith.constant 0 : i32
    return %c0_i32, %c0_i32_0 : i32, i32
  }
  func.func @transform_12(%arg0: i32) -> (i32, i32) {
    %c0_i32 = arith.constant 0 : i32
    %c0_i32_0 = arith.constant 0 : i32
    %c0_i32_1 = arith.constant 0 : i32
    return %c0_i32, %c0_i32_0 : i32, i32
  }
  func.func @transform_13(%arg0: i32) -> (i32, i32, i32) {
    %c0_i32 = arith.constant 0 : i32
    %c0_i32_0 = arith.constant 0 : i32
    %c0_i32_1 = arith.constant 0 : i32
    return %c0_i32, %arg0, %c0_i32_0 : i32, i32, i32
  }
}

</mosaic_0001>

<llo_original>
// kernel: tpu_custom_call.1
$region0: #{tpu_custom_call.1}
  #allocation0 [shape = 'u32[]', space=smem, size = 0x4, offset = 0x4, fixed_abs, tag = 'smem constant byte address 0x4 - core index']
  #allocation1 [shape = 'u32[72,128]{1,0:T(1,128)}', space=vmem, size = 0x9000, scoped, tag = 'internal scratch']
  #allocation2 [shape = 'f32[12,8,512]{2,1,0:T(8,128)}', space=vmem, size = 0x30000, scoped, tag = 'scratch operand']
  #allocation3 [shape = 'f32[4,8,512]{2,1,0:T(8,128)}', space=vmem, size = 0x10000, scoped, tag = 'scratch operand']
  #allocation4 [shape = 'f32[4,8,128]{2,1,0:T(8,128)}', space=vmem, size = 0x4000, scoped, tag = 'scratch operand']
  #allocation5 [shape = 'f32[8,128]{1,0:T(8,128)}', space=vmem, size = 0x1000, scoped, tag = 'scratch operand']
  #allocation6 [shape = 'f32[8,128]{1,0:T(8,128)}', space=vmem, size = 0x1000, scoped, tag = 'scratch operand']
  #allocation7 [shape = 'f32[8,128]{1,0:T(8,128)}', space=vmem, size = 0x1000, scoped, tag = 'scratch operand']
  #allocation8 [shape = 'f32[8,128]{1,0:T(8,128)}', space=vmem, size = 0x1000, scoped, tag = 'scratch operand']
  %s0 = inlined_call_operand.hbm [shape: f32[12,8,64], index: 0, kind: input, shape index: {}]
  %s1 = inlined_call_operand.hbm [shape: f32[4,8,128], index: 1, kind: input, shape index: {}]
  %s2 = inlined_call_operand.hbm [shape: f32[64,128], index: 2, kind: input, shape index: {}]
  %s3 = inlined_call_operand.hbm [shape: f32[1,128], index: 3, kind: input, shape index: {}]
  %s4 = inlined_call_operand.hbm [shape: f32[128,512], index: 4, kind: input, shape index: {}]
  %s5 = inlined_call_operand.hbm [shape: f32[128,512], index: 5, kind: input, shape index: {}]
  %s6 = inlined_call_operand.vmem [shape: f32[1,512], index: 6, kind: input, shape index: {}]
  %s7 = inlined_call_operand.hbm [shape: f32[128,512], index: 7, kind: input, shape index: {}]
  %s8 = inlined_call_operand.hbm [shape: f32[128,512], index: 8, kind: input, shape index: {}]
  %s9 = inlined_call_operand.hbm [shape: f32[128,512], index: 9, kind: input, shape index: {}]
  %s10 = inlined_call_operand.vmem [shape: f32[1,512], index: 10, kind: input, shape index: {}]
  %s11 = inlined_call_operand.hbm [shape: f32[128,128], index: 11, kind: input, shape index: {}]
  %s12 = inlined_call_operand.vmem [shape: f32[1,128], index: 12, kind: input, shape index: {}]
  %s13 = inlined_call_operand.hbm [shape: f32[4,8,128], index: 13, kind: output, shape index: {}]
  %s14 = sld [smem:[#allocation0]]
  $region116: #{tpu_custom_call.1} parent=0
    _
  %s16 = ssub.s32 1, %s14
  %s17 = scalar_select 0, %s16, %s14
  $region1: #{tpu_custom_call.1} parent=0
    #allocation9 [shape = 'u8[49152]{0}', space=vmem, size = 0xc000, scoped, tag = 'input window, operand 0, single buffered']
    #allocation10 [shape = 's32[1]{0}', space=sflag, size = 0x4, scoped, tag = 'scoped memory for tpu_custom_call.1']
    #allocation11 [shape = 's32[1]{0}', space=sflag, size = 0x4, scoped, tag = 'scoped memory for tpu_custom_call.1']
    #allocation12 [shape = 'u8[16384]{0}', space=vmem, size = 0x4000, scoped, tag = 'input window, operand 1, single buffered']
    #allocation13 [shape = 's32[1]{0}', space=sflag, size = 0x4, scoped, tag = 'scoped memory for tpu_custom_call.1']
    #allocation14 [shape = 'u8[32768]{0}', space=vmem, size = 0x8000, scoped, tag = 'input window, operand 2, single buffered']
    #allocation15 [shape = 'u8[512]{0}', space=vmem, size = 0x400, scoped, tag = 'input window, operand 3, single buffered']
    #allocation16 [shape = 's32[1]{0}', space=sflag, size = 0x4, scoped, tag = 'scoped memory for tpu_custom_call.1']
    #allocation17 [shape = 'u8[262144]{0}', space=vmem, size = 0x40000, scoped, tag = 'input window, operand 4, single buffered']
    #allocation18 [shape = 'u8[262144]{0}', space=vmem, size = 0x40000, scoped, tag = 'input window, operand 5, single buffered']
    #allocation19 [shape = 's32[1]{0}', space=sflag, size = 0x4, scoped, tag = 'scoped memory for tpu_custom_call.1']
    #allocation20 [shape = 'u8[262144]{0}', space=vmem, size = 0x40000, scoped, tag = 'input window, operand 7, single buffered']
    #allocation21 [shape = 'u8[262144]{0}', space=vmem, size = 0x40000, scoped, tag = 'input window, operand 8, single buffered']
    #allocation22 [shape = 's32[1]{0}', space=sflag, size = 0x4, scoped, tag = 'scoped memory for tpu_custom_call.1']
    #allocation23 [shape = 'u8[262144]{0}', space=vmem, size = 0x40000, scoped, tag = 'input window, operand 9, single buffered']
    #allocation24 [shape = 'u8[65536]{0}', space=vmem, size = 0x10000, scoped, tag = 'input window, operand 11, single buffered']
    #allocation25 [shape = 's32[1]{0}', space=sflag, size = 0x4, scoped, tag = 'scoped memory for tpu_custom_call.1']
    #allocation26 [shape = 'u8[16384]{0}', space=vmem, size = 0x4000, scoped, tag = 'output window, operand 0, single buffered']
    %18 = vsyncpa [#allocation10], 0
    %19 = vsyncpa [#allocation13], 0
    %20 = vsyncpa [#allocation16], 0
    %21 = vsyncpa [#allocation19], 0
    %22 = vsyncpa [#allocation22], 0
    %23 = vsyncpa [#allocation25], 0
    %24 = vsyncpa [#allocation11], 0
    // Predicated region
    $region2: #{tpu_custom_call.1} parent=1 // pred_check
      _
    $region3: #{tpu_custom_call.1} parent=1 // pred_check_branch
      %26 = sbr.rel (0) target = $region5
    $region4: #{tpu_custom_call.1} parent=1 // pred_region
      %28 = vsyncadd [#allocation10], 0
      %s29 = sshll.u32 %s0, 4
      %s30 = int_to_ptr.hbm [resolvable:$true] %s29
      %s31 = sshll.u32 [#allocation9], 4
      %s32 = int_to_ptr.vmem [resolvable:$true] %s31
      %37 = dma.hbm_to_vmem [thread:$0]  %s30, 1536, %s32, [#allocation10], 128, 128, 8
    $region5: #{tpu_custom_call.1} parent=1 // pred_fallthru
      _
    // Predicated region
    $region6: #{tpu_custom_call.1} parent=1 // pred_check
      _
    $region7: #{tpu_custom_call.1} parent=1 // pred_check_branch
      %39 = sbr.rel (0) target = $region9
    $region8: #{tpu_custom_call.1} parent=1 // pred_region
      %41 = vsyncadd [#allocation13], 0
      %s42 = sshll.u32 %s1, 4
      %s43 = int_to_ptr.hbm [resolvable:$true] %s42
      %s44 = sshll.u32 [#allocation12], 4
      %s45 = int_to_ptr.vmem [resolvable:$true] %s44
      %50 = dma.hbm_to_vmem [thread:$0]  %s43, 512, %s45, [#allocation13], 128, 128, 8
    $region9: #{tpu_custom_call.1} parent=1 // pred_fallthru
      _
    // Predicated region
    $region10: #{tpu_custom_call.1} parent=1 // pred_check
      _
    $region11: #{tpu_custom_call.1} parent=1 // pred_check_branch
      %52 = sbr.rel (0) target = $region13
    $region12: #{tpu_custom_call.1} parent=1 // pred_region
      %54 = vsyncadd [#allocation13], 0
      %s55 = sshll.u32 %s2, 4
      %s56 = int_to_ptr.hbm [resolvable:$true] %s55
      %s57 = sshll.u32 [#allocation14], 4
      %s58 = int_to_ptr.vmem [resolvable:$true] %s57
      %63 = dma.hbm_to_vmem [thread:$0]  %s56, 1024, %s58, [#allocation13], 128, 128, 8
    $region13: #{tpu_custom_call.1} parent=1 // pred_fallthru
      _
    // Predicated region
    $region14: #{tpu_custom_call.1} parent=1 // pred_check
      _
    $region15: #{tpu_custom_call.1} parent=1 // pred_check_branch
      %65 = sbr.rel (0) target = $region17
    $region16: #{tpu_custom_call.1} parent=1 // pred_region
      %67 = vsyncadd [#allocation16], 0
      %s69 = sshll.u32 %s3, 4
      %s70 = int_to_ptr.hbm [resolvable:$true] %s69
      %s71 = sshll.u32 [#allocation15], 4
      %s72 = int_to_ptr.vmem [resolvable:$true] %s71
      %74 = dma.hbm_to_vmem [thread:$0]  %s70, 16, %s72, [#allocation16]
    $region17: #{tpu_custom_call.1} parent=1 // pred_fallthru
      _
    // Predicated region
    $region18: #{tpu_custom_call.1} parent=1 // pred_check
      _
    $region19: #{tpu_custom_call.1} parent=1 // pred_check_branch
      %76 = sbr.rel (0) target = $region21
    $region20: #{tpu_custom_call.1} parent=1 // pred_region
      %78 = vsyncadd [#allocation16], 0
      %s79 = sshll.u32 %s4, 4
      %s80 = int_to_ptr.hbm [resolvable:$true] %s79
      %s81 = sshll.u32 [#allocation17], 4
      %s82 = int_to_ptr.vmem [resolvable:$true] %s81
      %87 = dma.hbm_to_vmem [thread:$0]  %s80, 8192, %s82, [#allocation16], 512, 512, 32
    $region21: #{tpu_custom_call.1} parent=1 // pred_fallthru
      _
    // Predicated region
    $region22: #{tpu_custom_call.1} parent=1 // pred_check
      _
    $region23: #{tpu_custom_call.1} parent=1 // pred_check_branch
      %89 = sbr.rel (0) target = $region25
    $region24: #{tpu_custom_call.1} parent=1 // pred_region
      %91 = vsyncadd [#allocation19], 0
      %s92 = sshll.u32 %s5, 4
      %s93 = int_to_ptr.hbm [resolvable:$true] %s92
      %s94 = sshll.u32 [#allocation18], 4
      %s95 = int_to_ptr.vmem [resolvable:$true] %s94
      %100 = dma.hbm_to_vmem [thread:$0]  %s93, 8192, %s95, [#allocation19], 512, 512, 32
    $region25: #{tpu_custom_call.1} parent=1 // pred_fallthru
      _
    // Predicated region
    $region26: #{tpu_custom_call.1} parent=1 // pred_check
      _
    $region27: #{tpu_custom_call.1} parent=1 // pred_check_branch
      %102 = sbr.rel (0) target = $region29
    $region28: #{tpu_custom_call.1} parent=1 // pred_region
      _
    $region29: #{tpu_custom_call.1} parent=1 // pred_fallthru
      _
    // Predicated region
    $region30: #{tpu_custom_call.1} parent=1 // pred_check
      _
    $region31: #{tpu_custom_call.1} parent=1 // pred_check_branch
      %104 = sbr.rel (0) target = $region33
    $region32: #{tpu_custom_call.1} parent=1 // pred_region
      %106 = vsyncadd [#allocation19], 0
      %s107 = sshll.u32 %s7, 4
      %s108 = int_to_ptr.hbm [resolvable:$true] %s107
      %s109 = sshll.u32 [#allocation20], 4
      %s110 = int_to_ptr.vmem [resolvable:$true] %s109
      %115 = dma.hbm_to_vmem [thread:$0]  %s108, 8192, %s110, [#allocation19], 512, 512, 32
    $region33: #{tpu_custom_call.1} parent=1 // pred_fallthru
      _
    // Predicated region
    $region34: #{tpu_custom_call.1} parent=1 // pred_check
      _
    $region35: #{tpu_custom_call.1} parent=1 // pred_check_branch
      %117 = sbr.rel (0) target = $region37
    $region36: #{tpu_custom_call.1} parent=1 // pred_region
      %119 = vsyncadd [#allocation22], 0
      %s120 = sshll.u32 %s8, 4
      %s121 = int_to_ptr.hbm [resolvable:$true] %s120
      %s122 = sshll.u32 [#allocation21], 4
      %s123 = int_to_ptr.vmem [resolvable:$true] %s122
      %128 = dma.hbm_to_vmem [thread:$0]  %s121, 8192, %s123, [#allocation22], 512, 512, 32
    $region37: #{tpu_custom_call.1} parent=1 // pred_fallthru
      _
    // Predicated region
    $region38: #{tpu_custom_call.1} parent=1 // pred_check
      _
    $region39: #{tpu_custom_call.1} parent=1 // pred_check_branch
      %130 = sbr.rel (0) target = $region41
    $region40: #{tpu_custom_call.1} parent=1 // pred_region
      %132 = vsyncadd [#allocation22], 0
      %s133 = sshll.u32 %s9, 4
      %s134 = int_to_ptr.hbm [resolvable:$true] %s133
      %s135 = sshll.u32 [#allocation23], 4
      %s136 = int_to_ptr.vmem [resolvable:$true] %s135
      %141 = dma.hbm_to_vmem [thread:$0]  %s134, 8192, %s136, [#allocation22], 512, 512, 32
    $region41: #{tpu_custom_call.1} parent=1 // pred_fallthru
      _
    // Predicated region
    $region42: #{tpu_custom_call.1} parent=1 // pred_check
      _
    $region43: #{tpu_custom_call.1} parent=1 // pred_check_branch
      %143 = sbr.rel (0) target = $region45
    $region44: #{tpu_custom_call.1} parent=1 // pred_region
      _
    $region45: #{tpu_custom_call.1} parent=1 // pred_fallthru
      _
    // Predicated region
    $region46: #{tpu_custom_call.1} parent=1 // pred_check
      _
    $region47: #{tpu_custom_call.1} parent=1 // pred_check_branch
      %145 = sbr.rel (0) target = $region49
    $region48: #{tpu_custom_call.1} parent=1 // pred_region
      %147 = vsyncadd [#allocation25], 0
      %s148 = sshll.u32 %s11, 4
      %s149 = int_to_ptr.hbm [resolvable:$true] %s148
      %s150 = sshll.u32 [#allocation24], 4
      %s151 = int_to_ptr.vmem [resolvable:$true] %s150
      %156 = dma.hbm_to_vmem [thread:$0]  %s149, 2048, %s151, [#allocation25], 128, 128, 8
    $region49: #{tpu_custom_call.1} parent=1 // pred_fallthru
      _
    // Predicated region
    $region50: #{tpu_custom_call.1} parent=1 // pred_check
      _
    $region51: #{tpu_custom_call.1} parent=1 // pred_check_branch
      %158 = sbr.rel (0) target = $region53
    $region52: #{tpu_custom_call.1} parent=1 // pred_region
      _
    $region53: #{tpu_custom_call.1} parent=1 // pred_fallthru
      _
    // Predicated region
    $region54: #{tpu_custom_call.1} parent=1 // pred_check
      _
    $region55: #{tpu_custom_call.1} parent=1 // pred_check_branch
      %160 = sbr.rel (0) target = $region57
    $region56: #{tpu_custom_call.1} parent=1 // pred_region
      %162 = dma.done [#allocation10], 1536
    $region57: #{tpu_custom_call.1} parent=1 // pred_fallthru
      _
    // Predicated region
    $region58: #{tpu_custom_call.1} parent=1 // pred_check
      _
    $region59: #{tpu_custom_call.1} parent=1 // pred_check_branch
      %164 = sbr.rel (0) target = $region61
    $region60: #{tpu_custom_call.1} parent=1 // pred_region
      %166 = dma.done [#allocation13], 512
    $region61: #{tpu_custom_call.1} parent=1 // pred_fallthru
      _
    // Predicated region
    $region62: #{tpu_custom_call.1} parent=1 // pred_check
      _
    $region63: #{tpu_custom_call.1} parent=1 // pred_check_branch
      %168 = sbr.rel (0) target = $region65
    $region64: #{tpu_custom_call.1} parent=1 // pred_region
      %170 = dma.done [#allocation13], 1024
    $region65: #{tpu_custom_call.1} parent=1 // pred_fallthru
      _
    // Predicated region
    $region66: #{tpu_custom_call.1} parent=1 // pred_check
      _
    $region67: #{tpu_custom_call.1} parent=1 // pred_check_branch
      %172 = sbr.rel (0) target = $region69
    $region68: #{tpu_custom_call.1} parent=1 // pred_region
      %174 = dma.done [#allocation16], 16
    $region69: #{tpu_custom_call.1} parent=1 // pred_fallthru
      _
    // Predicated region
    $region70: #{tpu_custom_call.1} parent=1 // pred_check
      _
    $region71: #{tpu_custom_call.1} parent=1 // pred_check_branch
      %176 = sbr.rel (0) target = $region73
    $region72: #{tpu_custom_call.1} parent=1 // pred_region
      %178 = dma.done [#allocation16], 8192
    $region73: #{tpu_custom_call.1} parent=1 // pred_fallthru
      _
    // Predicated region
    $region74: #{tpu_custom_call.1} parent=1 // pred_check
      _
    $region75: #{tpu_custom_call.1} parent=1 // pred_check_branch
      %180 = sbr.rel (0) target = $region77
    $region76: #{tpu_custom_call.1} parent=1 // pred_region
      %182 = dma.done [#allocation19], 8192
    $region77: #{tpu_custom_call.1} parent=1 // pred_fallthru
      _
    // Predicated region
    $region78: #{tpu_custom_call.1} parent=1 // pred_check
      _
    $region79: #{tpu_custom_call.1} parent=1 // pred_check_branch
      %184 = sbr.rel (0) target = $region81
    $region80: #{tpu_custom_call.1} parent=1 // pred_region
      %186 = dma.done [#allocation19], 8192
    $region81: #{tpu_custom_call.1} parent=1 // pred_fallthru
      _
    // Predicated region
    $region82: #{tpu_custom_call.1} parent=1 // pred_check
      _
    $region83: #{tpu_custom_call.1} parent=1 // pred_check_branch
      %188 = sbr.rel (0) target = $region85
    $region84: #{tpu_custom_call.1} parent=1 // pred_region
      %190 = dma.done [#allocation22], 8192
    $region85: #{tpu_custom_call.1} parent=1 // pred_fallthru
      _
    // Predicated region
    $region86: #{tpu_custom_call.1} parent=1 // pred_check
      _
    $region87: #{tpu_custom_call.1} parent=1 // pred_check_branch
      %192 = sbr.rel (0) target = $region89
    $region88: #{tpu_custom_call.1} parent=1 // pred_region
      %194 = dma.done [#allocation22], 8192
    $region89: #{tpu_custom_call.1} parent=1 // pred_fallthru
      _
    // Predicated region
    $region90: #{tpu_custom_call.1} parent=1 // pred_check
      _
    $region91: #{tpu_custom_call.1} parent=1 // pred_check_branch
      %196 = sbr.rel (0) target = $region93
    $region92: #{tpu_custom_call.1} parent=1 // pred_region
      %198 = dma.done [#allocation25], 2048
    $region93: #{tpu_custom_call.1} parent=1 // pred_fallthru
      _
    %v199 = vld [vmem:[#allocation9] sm:$0xff]
    %v200 = vld [vmem:[#allocation9 + $0x8] sm:$0xff]
    %v201 = vld [vmem:[#allocation9 + $0x10] sm:$0xff]
    %v202 = vld [vmem:[#allocation9 + $0x18] sm:$0xff]
    %v203 = vld [vmem:[#allocation9 + $0x20] sm:$0xff]
    %v204 = vld [vmem:[#allocation9 + $0x28] sm:$0xff]
    %v205 = vld [vmem:[#allocation9 + $0x30] sm:$0xff]
    %v206 = vld [vmem:[#allocation9 + $0x38] sm:$0xff]
    %v207 = vld [vmem:[#allocation9 + $0x40] sm:$0xff]
    %v208 = vld [vmem:[#allocation9 + $0x48] sm:$0xff]
    %v209 = vld [vmem:[#allocation9 + $0x50] sm:$0xff]
    %v210 = vld [vmem:[#allocation9 + $0x58] sm:$0xff]
    %v211 = vld [vmem:[#allocation14] sm:$0xff]
    %v212 = vld [vmem:[#allocation14 + $0x8] sm:$0xff]
    %v213 = vld [vmem:[#allocation14 + $0x10] sm:$0xff]
    %v214 = vld [vmem:[#allocation14 + $0x18] sm:$0xff]
    %v215 = vld [vmem:[#allocation14 + $0x20] sm:$0xff]
    %v216 = vld [vmem:[#allocation14 + $0x28] sm:$0xff]
    %v217 = vld [vmem:[#allocation14 + $0x30] sm:$0xff]
    %v218 = vld [vmem:[#allocation14 + $0x38] sm:$0xff]
    %v219 = vld [vmem:[#allocation15] sm:$0x1]
    %v221 = vperm.slane %v219, 0
    %vm223 = vcmask 523264
    %v225 = vsel %vm223, %v199, 0
    %v228 = vsel %vm223, %v200, 0
    %v231 = vsel %vm223, %v201, 0
    %v234 = vsel %vm223, %v202, 0
    %v237 = vsel %vm223, %v203, 0
    %v240 = vsel %vm223, %v204, 0
    %v243 = vsel %vm223, %v205, 0
    %v246 = vsel %vm223, %v206, 0
    %v249 = vsel %vm223, %v207, 0
    %v252 = vsel %vm223, %v208, 0
    %v255 = vsel %vm223, %v209, 0
    %v258 = vsel %vm223, %v210, 0
    %260 = vmatpush.msra.mxu0 0.0
    %261 = vmatpush.msra.mxu0 0.0
    %262 = vmatpush.msra.mxu0 0.0
    %263 = vmatpush.msra.mxu0 0.0
    %264 = vmatpush.msra.mxu0 0.0
    %265 = vmatpush.msra.mxu0 0.0
    %266 = vmatpush.msra.mxu0 0.0
    %267 = vmatpush.msra.mxu0 0.0
    %268 = vmatpush.msra.mxu0 %v218
    %269 = vmatpush.msra.mxu0 %v217
    %270 = vmatpush.msra.mxu0 %v216
    %271 = vmatpush.msra.mxu0 %v215
    %272 = vmatpush.msra.mxu0 %v214
    %273 = vmatpush.msra.mxu0 %v213
    %274 = vmatpush.msra.mxu0 %v212
    %275 = vmatpush.msra.mxu0 %v211
    %276 = vmatmul.f32.gmra.mxu0 %v225
    %v277 = vpop.f32.mrf.mxu0
    %v278 = vadd.f32 %v221, %v277
    %279 = vmatmul.f32.gmra.mxu0 %v228
    %v280 = vpop.f32.mrf.mxu0
    %v281 = vadd.f32 %v221, %v280
    %282 = vmatmul.f32.gmra.mxu0 %v231
    %v283 = vpop.f32.mrf.mxu0
    %v284 = vadd.f32 %v221, %v283
    %285 = vmatmul.f32.gmra.mxu0 %v234
    %v286 = vpop.f32.mrf.mxu0
    %v287 = vadd.f32 %v221, %v286
    %288 = vmatmul.f32.gmra.mxu0 %v237
    %v289 = vpop.f32.mrf.mxu0
    %v290 = vadd.f32 %v221, %v289
    %291 = vmatmul.f32.gmra.mxu0 %v240
    %v292 = vpop.f32.mrf.mxu0
    %v293 = vadd.f32 %v221, %v292
    %294 = vmatmul.f32.gmra.mxu0 %v243
    %v295 = vpop.f32.mrf.mxu0
    %v296 = vadd.f32 %v221, %v295
    %297 = vmatmul.f32.gmra.mxu0 %v246
    %v298 = vpop.f32.mrf.mxu0
    %v299 = vadd.f32 %v221, %v298
    %300 = vmatmul.f32.gmra.mxu0 %v249
    %v301 = vpop.f32.mrf.mxu0
    %v302 = vadd.f32 %v221, %v301
    %303 = vmatmul.f32.gmra.mxu0 %v252
    %v304 = vpop.f32.mrf.mxu0
    %v305 = vadd.f32 %v221, %v304
    %306 = vmatmul.f32.gmra.mxu0 %v255
    %v307 = vpop.f32.mrf.mxu0
    %v308 = vadd.f32 %v221, %v307
    %309 = vmatmul.f32.gmra.mxu0 %v258
    %v310 = vpop.f32.mrf.mxu0
    %v311 = vadd.f32 %v221, %v310
    %312 = vdwg.mxu0
    %v313 = vld [vmem:[#allocation17] sm:$0xff]
    %v314 = vld [vmem:[#allocation17 + $0x8] sm:$0xff]
    %v315 = vld [vmem:[#allocation17 + $0x10] sm:$0xff]
    %v316 = vld [vmem:[#allocation17 + $0x18] sm:$0xff]
    %v317 = vld [vmem:[#allocation17 + $0x20] sm:$0xff]
    %v318 = vld [vmem:[#allocation17 + $0x28] sm:$0xff]
    %v319 = vld [vmem:[#allocation17 + $0x30] sm:$0xff]
    %v320 = vld [vmem:[#allocation17 + $0x38] sm:$0xff]
    %v321 = vld [vmem:[#allocation17 + $0x40] sm:$0xff]
    %v322 = vld [vmem:[#allocation17 + $0x48] sm:$0xff]
    %v323 = vld [vmem:[#allocation17 + $0x50] sm:$0xff]
    %v324 = vld [vmem:[#allocation17 + $0x58] sm:$0xff]
    %v325 = vld [vmem:[#allocation17 + $0x60] sm:$0xff]
    %v326 = vld [vmem:[#allocation17 + $0x68] sm:$0xff]
    %v327 = vld [vmem:[#allocation17 + $0x70] sm:$0xff]
    %v328 = vld [vmem:[#allocation17 + $0x78] sm:$0xff]
    %v329 = vld [vmem:[#allocation17 + $0x80] sm:$0xff]
    %v330 = vld [vmem:[#allocation17 + $0x88] sm:$0xff]
    %v331 = vld [vmem:[#allocation17 + $0x90] sm:$0xff]
    %v332 = vld [vmem:[#allocation17 + $0x98] sm:$0xff]
    %v333 = vld [vmem:[#allocation17 + $0xa0] sm:$0xff]
    %v334 = vld [vmem:[#allocation17 + $0xa8] sm:$0xff]
    %v335 = vld [vmem:[#allocation17 + $0xb0] sm:$0xff]
    %v336 = vld [vmem:[#allocation17 + $0xb8] sm:$0xff]
    %v337 = vld [vmem:[#allocation17 + $0xc0] sm:$0xff]
    %v338 = vld [vmem:[#allocation17 + $0xc8] sm:$0xff]
    %v339 = vld [vmem:[#allocation17 + $0xd0] sm:$0xff]
    %v340 = vld [vmem:[#allocation17 + $0xd8] sm:$0xff]
    %v341 = vld [vmem:[#allocation17 + $0xe0] sm:$0xff]
    %v342 = vld [vmem:[#allocation17 + $0xe8] sm:$0xff]
    %v343 = vld [vmem:[#allocation17 + $0xf0] sm:$0xff]
    %v344 = vld [vmem:[#allocation17 + $0xf8] sm:$0xff]
    %v345 = vld [vmem:[#allocation17 + $0x100] sm:$0xff]
    %v346 = vld [vmem:[#allocation17 + $0x108] sm:$0xff]
    %v347 = vld [vmem:[#allocation17 + $0x110] sm:$0xff]
    %v348 = vld [vmem:[#allocation17 + $0x118] sm:$0xff]
    %v349 = vld [vmem:[#allocation17 + $0x120] sm:$0xff]
    %v350 = vld [vmem:[#allocation17 + $0x128] sm:$0xff]
    %v351 = vld [vmem:[#allocation17 + $0x130] sm:$0xff]
    %v352 = vld [vmem:[#allocation17 + $0x138] sm:$0xff]
    %v353 = vld [vmem:[#allocation17 + $0x140] sm:$0xff]
    %v354 = vld [vmem:[#allocation17 + $0x148] sm:$0xff]
    %v355 = vld [vmem:[#allocation17 + $0x150] sm:$0xff]
    %v356 = vld [vmem:[#allocation17 + $0x158] sm:$0xff]
    %v357 = vld [vmem:[#allocation17 + $0x160] sm:$0xff]
    %v358 = vld [vmem:[#allocation17 + $0x168] sm:$0xff]
    %v359 = vld [vmem:[#allocation17 + $0x170] sm:$0xff]
    %v360 = vld [vmem:[#allocation17 + $0x178] sm:$0xff]
    %v361 = vld [vmem:[#allocation17 + $0x180] sm:$0xff]
    %v362 = vld [vmem:[#allocation17 + $0x188] sm:$0xff]
    %v363 = vld [vmem:[#allocation17 + $0x190] sm:$0xff]
    %v364 = vld [vmem:[#allocation17 + $0x198] sm:$0xff]
    %v365 = vld [vmem:[#allocation17 + $0x1a0] sm:$0xff]
    %v366 = vld [vmem:[#allocation17 + $0x1a8] sm:$0xff]
    %v367 = vld [vmem:[#allocation17 + $0x1b0] sm:$0xff]
    %v368 = vld [vmem:[#allocation17 + $0x1b8] sm:$0xff]
    %v369 = vld [vmem:[#allocation17 + $0x1c0] sm:$0xff]
    %v370 = vld [vmem:[#allocation17 + $0x1c8] sm:$0xff]
    %v371 = vld [vmem:[#allocation17 + $0x1d0] sm:$0xff]
    %v372 = vld [vmem:[#allocation17 + $0x1d8] sm:$0xff]
    %v373 = vld [vmem:[#allocation17 + $0x1e0] sm:$0xff]
    %v374 = vld [vmem:[#allocation17 + $0x1e8] sm:$0xff]
    %v375 = vld [vmem:[#allocation17 + $0x1f0] sm:$0xff]
    %v376 = vld [vmem:[#allocation17 + $0x1f8] sm:$0xff]
    %v377 = vld [vmem:[%s6] sm:$0xf]
    %v379 = vperm.slane %v377, 0
    %v380 = vperm.slane %v377, 1
    %v381 = vperm.slane %v377, 2
    %v382 = vperm.slane %v377, 3
    %387 = vmatpush.msra.mxu0 %v373
    %388 = vmatpush.msra.mxu0 %v369
    %389 = vmatpush.msra.mxu0 %v365
    %390 = vmatpush.msra.mxu0 %v361
    %391 = vmatpush.msra.mxu0 %v357
    %392 = vmatpush.msra.mxu0 %v353
    %393 = vmatpush.msra.mxu0 %v349
    %394 = vmatpush.msra.mxu0 %v345
    %395 = vmatpush.msra.mxu0 %v341
    %396 = vmatpush.msra.mxu0 %v337
    %397 = vmatpush.msra.mxu0 %v333
    %398 = vmatpush.msra.mxu0 %v329
    %399 = vmatpush.msra.mxu0 %v325
    %400 = vmatpush.msra.mxu0 %v321
    %401 = vmatpush.msra.mxu0 %v317
    %402 = vmatpush.msra.mxu0 %v313
    %403 = vmatmul.f32.gmra.mxu0 %v278
    %v404 = vpop.f32.mrf.mxu0
    %v405 = vadd.f32 %v379, %v404
    %406 = vmatmul.f32.gmra.mxu0 %v281
    %v407 = vpop.f32.mrf.mxu0
    %v408 = vadd.f32 %v379, %v407
    %409 = vmatmul.f32.gmra.mxu0 %v284
    %v410 = vpop.f32.mrf.mxu0
    %v411 = vadd.f32 %v379, %v410
    %412 = vmatmul.f32.gmra.mxu0 %v287
    %v413 = vpop.f32.mrf.mxu0
    %v414 = vadd.f32 %v379, %v413
    %415 = vmatmul.f32.gmra.mxu0 %v290
    %v416 = vpop.f32.mrf.mxu0
    %v417 = vadd.f32 %v379, %v416
    %418 = vmatmul.f32.gmra.mxu0 %v293
    %v419 = vpop.f32.mrf.mxu0
    %v420 = vadd.f32 %v379, %v419
    %421 = vmatmul.f32.gmra.mxu0 %v296
    %v422 = vpop.f32.mrf.mxu0
    %v423 = vadd.f32 %v379, %v422
    %424 = vmatmul.f32.gmra.mxu0 %v299
    %v425 = vpop.f32.mrf.mxu0
    %v426 = vadd.f32 %v379, %v425
    %427 = vmatmul.f32.gmra.mxu0 %v302
    %v428 = vpop.f32.mrf.mxu0
    %v429 = vadd.f32 %v379, %v428
    %430 = vmatmul.f32.gmra.mxu0 %v305
    %v431 = vpop.f32.mrf.mxu0
    %v432 = vadd.f32 %v379, %v431
    %433 = vmatmul.f32.gmra.mxu0 %v308
    %v434 = vpop.f32.mrf.mxu0
    %v435 = vadd.f32 %v379, %v434
    %436 = vmatmul.f32.gmra.mxu0 %v311
    %v437 = vpop.f32.mrf.mxu0
    %v438 = vadd.f32 %v379, %v437
    %439 = vdwg.mxu0
    %440 = vmatpush.msra.mxu0 %v374
    %441 = vmatpush.msra.mxu0 %v370
    %442 = vmatpush.msra.mxu0 %v366
    %443 = vmatpush.msra.mxu0 %v362
    %444 = vmatpush.msra.mxu0 %v358
    %445 = vmatpush.msra.mxu0 %v354
    %446 = vmatpush.msra.mxu0 %v350
    %447 = vmatpush.msra.mxu0 %v346
    %448 = vmatpush.msra.mxu0 %v342
    %449 = vmatpush.msra.mxu0 %v338
    %450 = vmatpush.msra.mxu0 %v334
    %451 = vmatpush.msra.mxu0 %v330
    %452 = vmatpush.msra.mxu0 %v326
    %453 = vmatpush.msra.mxu0 %v322
    %454 = vmatpush.msra.mxu0 %v318
    %455 = vmatpush.msra.mxu0 %v314
    %456 = vmatmul.f32.gmra.mxu0 %v278
    %v457 = vpop.f32.mrf.mxu0
    %v458 = vadd.f32 %v380, %v457
    %459 = vmatmul.f32.gmra.mxu0 %v281
    %v460 = vpop.f32.mrf.mxu0
    %v461 = vadd.f32 %v380, %v460
    %462 = vmatmul.f32.gmra.mxu0 %v284
    %v463 = vpop.f32.mrf.mxu0
    %v464 = vadd.f32 %v380, %v463
    %465 = vmatmul.f32.gmra.mxu0 %v287
    %v466 = vpop.f32.mrf.mxu0
    %v467 = vadd.f32 %v380, %v466
    %468 = vmatmul.f32.gmra.mxu0 %v290
    %v469 = vpop.f32.mrf.mxu0
    %v470 = vadd.f32 %v380, %v469
    %471 = vmatmul.f32.gmra.mxu0 %v293
    %v472 = vpop.f32.mrf.mxu0
    %v473 = vadd.f32 %v380, %v472
    %474 = vmatmul.f32.gmra.mxu0 %v296
    %v475 = vpop.f32.mrf.mxu0
    %v476 = vadd.f32 %v380, %v475
    %477 = vmatmul.f32.gmra.mxu0 %v299
    %v478 = vpop.f32.mrf.mxu0
    %v479 = vadd.f32 %v380, %v478
    %480 = vmatmul.f32.gmra.mxu0 %v302
    %v481 = vpop.f32.mrf.mxu0
    %v482 = vadd.f32 %v380, %v481
    %483 = vmatmul.f32.gmra.mxu0 %v305
    %v484 = vpop.f32.mrf.mxu0
    %v485 = vadd.f32 %v380, %v484
    %486 = vmatmul.f32.gmra.mxu0 %v308
    %v487 = vpop.f32.mrf.mxu0
    %v488 = vadd.f32 %v380, %v487
    %489 = vmatmul.f32.gmra.mxu0 %v311
    %v490 = vpop.f32.mrf.mxu0
    %v491 = vadd.f32 %v380, %v490
    %492 = vdwg.mxu0
    %493 = vmatpush.msra.mxu0 %v375
    %494 = vmatpush.msra.mxu0 %v371
    %495 = vmatpush.msra.mxu0 %v367
    %496 = vmatpush.msra.mxu0 %v363
    %497 = vmatpush.msra.mxu0 %v359
    %498 = vmatpush.msra.mxu0 %v355
    %499 = vmatpush.msra.mxu0 %v351
    %500 = vmatpush.msra.mxu0 %v347
    %501 = vmatpush.msra.mxu0 %v343
    %502 = vmatpush.msra.mxu0 %v339
    %503 = vmatpush.msra.mxu0 %v335
    %504 = vmatpush.msra.mxu0 %v331
    %505 = vmatpush.msra.mxu0 %v327
    %506 = vmatpush.msra.mxu0 %v323
    %507 = vmatpush.msra.mxu0 %v319
    %508 = vmatpush.msra.mxu0 %v315
    %509 = vmatmul.f32.gmra.mxu0 %v278
    %v510 = vpop.f32.mrf.mxu0
    %v511 = vadd.f32 %v381, %v510
    %512 = vmatmul.f32.gmra.mxu0 %v281
    %v513 = vpop.f32.mrf.mxu0
    %v514 = vadd.f32 %v381, %v513
    %515 = vmatmul.f32.gmra.mxu0 %v284
    %v516 = vpop.f32.mrf.mxu0
    %v517 = vadd.f32 %v381, %v516
    %518 = vmatmul.f32.gmra.mxu0 %v287
    %v519 = vpop.f32.mrf.mxu0
    %v520 = vadd.f32 %v381, %v519
    %521 = vmatmul.f32.gmra.mxu0 %v290
    %v522 = vpop.f32.mrf.mxu0
    %v523 = vadd.f32 %v381, %v522
    %524 = vmatmul.f32.gmra.mxu0 %v293
    %v525 = vpop.f32.mrf.mxu0
    %v526 = vadd.f32 %v381, %v525
    %527 = vmatmul.f32.gmra.mxu0 %v296
    %v528 = vpop.f32.mrf.mxu0
    %v529 = vadd.f32 %v381, %v528
    %530 = vmatmul.f32.gmra.mxu0 %v299
    %v531 = vpop.f32.mrf.mxu0
    %v532 = vadd.f32 %v381, %v531
    %533 = vmatmul.f32.gmra.mxu0 %v302
    %v534 = vpop.f32.mrf.mxu0
    %v535 = vadd.f32 %v381, %v534
    %536 = vmatmul.f32.gmra.mxu0 %v305
    %v537 = vpop.f32.mrf.mxu0
    %v538 = vadd.f32 %v381, %v537
    %539 = vmatmul.f32.gmra.mxu0 %v308
    %v540 = vpop.f32.mrf.mxu0
    %v541 = vadd.f32 %v381, %v540
    %542 = vmatmul.f32.gmra.mxu0 %v311
    %v543 = vpop.f32.mrf.mxu0
    %v544 = vadd.f32 %v381, %v543
    %545 = vdwg.mxu0
    %546 = vmatpush.msra.mxu0 %v376
    %547 = vmatpush.msra.mxu0 %v372
    %548 = vmatpush.msra.mxu0 %v368
    %549 = vmatpush.msra.mxu0 %v364
    %550 = vmatpush.msra.mxu0 %v360
    %551 = vmatpush.msra.mxu0 %v356
    %552 = vmatpush.msra.mxu0 %v352
    %553 = vmatpush.msra.mxu0 %v348
    %554 = vmatpush.msra.mxu0 %v344
    %555 = vmatpush.msra.mxu0 %v340
    %556 = vmatpush.msra.mxu0 %v336
    %557 = vmatpush.msra.mxu0 %v332
    %558 = vmatpush.msra.mxu0 %v328
    %559 = vmatpush.msra.mxu0 %v324
    %560 = vmatpush.msra.mxu0 %v320
    %561 = vmatpush.msra.mxu0 %v316
    %562 = vmatmul.f32.gmra.mxu0 %v278
    %v563 = vpop.f32.mrf.mxu0
    %v564 = vadd.f32 %v382, %v563
    %565 = vmatmul.f32.gmra.mxu0 %v281
    %v566 = vpop.f32.mrf.mxu0
    %v567 = vadd.f32 %v382, %v566
    %568 = vmatmul.f32.gmra.mxu0 %v284
    %v569 = vpop.f32.mrf.mxu0
    %v570 = vadd.f32 %v382, %v569
    %571 = vmatmul.f32.gmra.mxu0 %v287
    %v572 = vpop.f32.mrf.mxu0
    %v573 = vadd.f32 %v382, %v572
    %574 = vmatmul.f32.gmra.mxu0 %v290
    %v575 = vpop.f32.mrf.mxu0
    %v576 = vadd.f32 %v382, %v575
    %577 = vmatmul.f32.gmra.mxu0 %v293
    %v578 = vpop.f32.mrf.mxu0
    %v579 = vadd.f32 %v382, %v578
    %580 = vmatmul.f32.gmra.mxu0 %v296
    %v581 = vpop.f32.mrf.mxu0
    %v582 = vadd.f32 %v382, %v581
    %583 = vmatmul.f32.gmra.mxu0 %v299
    %v584 = vpop.f32.mrf.mxu0
    %v585 = vadd.f32 %v382, %v584
    %586 = vmatmul.f32.gmra.mxu0 %v302
    %v587 = vpop.f32.mrf.mxu0
    %v588 = vadd.f32 %v382, %v587
    %589 = vmatmul.f32.gmra.mxu0 %v305
    %v590 = vpop.f32.mrf.mxu0
    %v591 = vadd.f32 %v382, %v590
    %592 = vmatmul.f32.gmra.mxu0 %v308
    %v593 = vpop.f32.mrf.mxu0
    %v594 = vadd.f32 %v382, %v593
    %595 = vmatmul.f32.gmra.mxu0 %v311
    %v596 = vpop.f32.mrf.mxu0
    %v597 = vadd.f32 %v382, %v596
    %598 = vdwg.mxu0
    %599 = vst [vmem:[#allocation2] sm:$0xff] %v405
    %600 = vst [vmem:[#allocation2 + $0x8] sm:$0xff] %v458
    %601 = vst [vmem:[#allocation2 + $0x10] sm:$0xff] %v511
    %602 = vst [vmem:[#allocation2 + $0x18] sm:$0xff] %v564
    %603 = vst [vmem:[#allocation2 + $0x20] sm:$0xff] %v408
    %604 = vst [vmem:[#allocation2 + $0x28] sm:$0xff] %v461
    %605 = vst [vmem:[#allocation2 + $0x30] sm:$0xff] %v514
    %606 = vst [vmem:[#allocation2 + $0x38] sm:$0xff] %v567
    %607 = vst [vmem:[#allocation2 + $0x40] sm:$0xff] %v411
    %608 = vst [vmem:[#allocation2 + $0x48] sm:$0xff] %v464
    %609 = vst [vmem:[#allocation2 + $0x50] sm:$0xff] %v517
    %610 = vst [vmem:[#allocation2 + $0x58] sm:$0xff] %v570
    %611 = vst [vmem:[#allocation2 + $0x60] sm:$0xff] %v414
    %612 = vst [vmem:[#allocation2 + $0x68] sm:$0xff] %v467
    %613 = vst [vmem:[#allocation2 + $0x70] sm:$0xff] %v520
    %614 = vst [vmem:[#allocation2 + $0x78] sm:$0xff] %v573
    %615 = vst [vmem:[#allocation2 + $0x80] sm:$0xff] %v417
    %616 = vst [vmem:[#allocation2 + $0x88] sm:$0xff] %v470
    %617 = vst [vmem:[#allocation2 + $0x90] sm:$0xff] %v523
    %618 = vst [vmem:[#allocation2 + $0x98] sm:$0xff] %v576
    %619 = vst [vmem:[#allocation2 + $0xa0] sm:$0xff] %v420
    %620 = vst [vmem:[#allocation2 + $0xa8] sm:$0xff] %v473
    %621 = vst [vmem:[#allocation2 + $0xb0] sm:$0xff] %v526
    %622 = vst [vmem:[#allocation2 + $0xb8] sm:$0xff] %v579
    %623 = vst [vmem:[#allocation2 + $0xc0] sm:$0xff] %v423
    %624 = vst [vmem:[#allocation2 + $0xc8] sm:$0xff] %v476
    %625 = vst [vmem:[#allocation2 + $0xd0] sm:$0xff] %v529
    %626 = vst [vmem:[#allocation2 + $0xd8] sm:$0xff] %v582
    %627 = vst [vmem:[#allocation2 + $0xe0] sm:$0xff] %v426
    %628 = vst [vmem:[#allocation2 + $0xe8] sm:$0xff] %v479
    %629 = vst [vmem:[#allocation2 + $0xf0] sm:$0xff] %v532
    %630 = vst [vmem:[#allocation2 + $0xf8] sm:$0xff] %v585
    %631 = vst [vmem:[#allocation2 + $0x100] sm:$0xff] %v429
    %632 = vst [vmem:[#allocation2 + $0x108] sm:$0xff] %v482
    %633 = vst [vmem:[#allocation2 + $0x110] sm:$0xff] %v535
    %634 = vst [vmem:[#allocation2 + $0x118] sm:$0xff] %v588
    %635 = vst [vmem:[#allocation2 + $0x120] sm:$0xff] %v432
    %636 = vst [vmem:[#allocation2 + $0x128] sm:$0xff] %v485
    %637 = vst [vmem:[#allocation2 + $0x130] sm:$0xff] %v538
    %638 = vst [vmem:[#allocation2 + $0x138] sm:$0xff] %v591
    %639 = vst [vmem:[#allocation2 + $0x140] sm:$0xff] %v435
    %640 = vst [vmem:[#allocation2 + $0x148] sm:$0xff] %v488
    %641 = vst [vmem:[#allocation2 + $0x150] sm:$0xff] %v541
    %642 = vst [vmem:[#allocation2 + $0x158] sm:$0xff] %v594
    %643 = vst [vmem:[#allocation2 + $0x160] sm:$0xff] %v438
    %644 = vst [vmem:[#allocation2 + $0x168] sm:$0xff] %v491
    %645 = vst [vmem:[#allocation2 + $0x170] sm:$0xff] %v544
    %646 = vst [vmem:[#allocation2 + $0x178] sm:$0xff] %v597
    %v647 = vld [vmem:[#allocation12] sm:$0xff]
    %v648 = vld [vmem:[#allocation12 + $0x8] sm:$0xff]
    %v649 = vld [vmem:[#allocation12 + $0x10] sm:$0xff]
    %v650 = vld [vmem:[#allocation12 + $0x18] sm:$0xff]
    %v651 = vld [vmem:[#allocation21] sm:$0xff]
    %v652 = vld [vmem:[#allocation21 + $0x8] sm:$0xff]
    %v653 = vld [vmem:[#allocation21 + $0x10] sm:$0xff]
    %v654 = vld [vmem:[#allocation21 + $0x18] sm:$0xff]
    %v655 = vld [vmem:[#allocation21 + $0x20] sm:$0xff]
    %v656 = vld [vmem:[#allocation21 + $0x28] sm:$0xff]
    %v657 = vld [vmem:[#allocation21 + $0x30] sm:$0xff]
    %v658 = vld [vmem:[#allocation21 + $0x38] sm:$0xff]
    %v659 = vld [vmem:[#allocation21 + $0x40] sm:$0xff]
    %v660 = vld [vmem:[#allocation21 + $0x48] sm:$0xff]
    %v661 = vld [vmem:[#allocation21 + $0x50] sm:$0xff]
    %v662 = vld [vmem:[#allocation21 + $0x58] sm:$0xff]
    %v663 = vld [vmem:[#allocation21 + $0x60] sm:$0xff]
    %v664 = vld [vmem:[#allocation21 + $0x68] sm:$0xff]
    %v665 = vld [vmem:[#allocation21 + $0x70] sm:$0xff]
    %v666 = vld [vmem:[#allocation21 + $0x78] sm:$0xff]
    %v667 = vld [vmem:[#allocation21 + $0x80] sm:$0xff]
    %v668 = vld [vmem:[#allocation21 + $0x88] sm:$0xff]
    %v669 = vld [vmem:[#allocation21 + $0x90] sm:$0xff]
    %v670 = vld [vmem:[#allocation21 + $0x98] sm:$0xff]
    %v671 = vld [vmem:[#allocation21 + $0xa0] sm:$0xff]
    %v672 = vld [vmem:[#allocation21 + $0xa8] sm:$0xff]
    %v673 = vld [vmem:[#allocation21 + $0xb0] sm:$0xff]
    %v674 = vld [vmem:[#allocation21 + $0xb8] sm:$0xff]
    %v675 = vld [vmem:[#allocation21 + $0xc0] sm:$0xff]
    %v676 = vld [vmem:[#allocation21 + $0xc8] sm:$0xff]
    %v677 = vld [vmem:[#allocation21 + $0xd0] sm:$0xff]
    %v678 = vld [vmem:[#allocation21 + $0xd8] sm:$0xff]
    %v679 = vld [vmem:[#allocation21 + $0xe0] sm:$0xff]
    %v680 = vld [vmem:[#allocation21 + $0xe8] sm:$0xff]
    %v681 = vld [vmem:[#allocation21 + $0xf0] sm:$0xff]
    %v682 = vld [vmem:[#allocation21 + $0xf8] sm:$0xff]
    %v683 = vld [vmem:[#allocation21 + $0x100] sm:$0xff]
    %v684 = vld [vmem:[#allocation21 + $0x108] sm:$0xff]
    %v685 = vld [vmem:[#allocation21 + $0x110] sm:$0xff]
    %v686 = vld [vmem:[#allocation21 + $0x118] sm:$0xff]
    %v687 = vld [vmem:[#allocation21 + $0x120] sm:$0xff]
    %v688 = vld [vmem:[#allocation21 + $0x128] sm:$0xff]
    %v689 = vld [vmem:[#allocation21 + $0x130] sm:$0xff]
    %v690 = vld [vmem:[#allocation21 + $0x138] sm:$0xff]
    %v691 = vld [vmem:[#allocation21 + $0x140] sm:$0xff]
    %v692 = vld [vmem:[#allocation21 + $0x148] sm:$0xff]
    %v693 = vld [vmem:[#allocation21 + $0x150] sm:$0xff]
    %v694 = vld [vmem:[#allocation21 + $0x158] sm:$0xff]
    %v695 = vld [vmem:[#allocation21 + $0x160] sm:$0xff]
    %v696 = vld [vmem:[#allocation21 + $0x168] sm:$0xff]
    %v697 = vld [vmem:[#allocation21 + $0x170] sm:$0xff]
    %v698 = vld [vmem:[#allocation21 + $0x178] sm:$0xff]
    %v699 = vld [vmem:[#allocation21 + $0x180] sm:$0xff]
    %v700 = vld [vmem:[#allocation21 + $0x188] sm:$0xff]
    %v701 = vld [vmem:[#allocation21 + $0x190] sm:$0xff]
    %v702 = vld [vmem:[#allocation21 + $0x198] sm:$0xff]
    %v703 = vld [vmem:[#allocation21 + $0x1a0] sm:$0xff]
    %v704 = vld [vmem:[#allocation21 + $0x1a8] sm:$0xff]
    %v705 = vld [vmem:[#allocation21 + $0x1b0] sm:$0xff]
    %v706 = vld [vmem:[#allocation21 + $0x1b8] sm:$0xff]
    %v707 = vld [vmem:[#allocation21 + $0x1c0] sm:$0xff]
    %v708 = vld [vmem:[#allocation21 + $0x1c8] sm:$0xff]
    %v709 = vld [vmem:[#allocation21 + $0x1d0] sm:$0xff]
    %v710 = vld [vmem:[#allocation21 + $0x1d8] sm:$0xff]
    %v711 = vld [vmem:[#allocation21 + $0x1e0] sm:$0xff]
    %v712 = vld [vmem:[#allocation21 + $0x1e8] sm:$0xff]
    %v713 = vld [vmem:[#allocation21 + $0x1f0] sm:$0xff]
    %v714 = vld [vmem:[#allocation21 + $0x1f8] sm:$0xff]
    %715 = vmatpush.msra.mxu0 %v711
    %716 = vmatpush.msra.mxu0 %v707
    %717 = vmatpush.msra.mxu0 %v703
    %718 = vmatpush.msra.mxu0 %v699
    %719 = vmatpush.msra.mxu0 %v695
    %720 = vmatpush.msra.mxu0 %v691
    %721 = vmatpush.msra.mxu0 %v687
    %722 = vmatpush.msra.mxu0 %v683
    %723 = vmatpush.msra.mxu0 %v679
    %724 = vmatpush.msra.mxu0 %v675
    %725 = vmatpush.msra.mxu0 %v671
    %726 = vmatpush.msra.mxu0 %v667
    %727 = vmatpush.msra.mxu0 %v663
    %728 = vmatpush.msra.mxu0 %v659
    %729 = vmatpush.msra.mxu0 %v655
    %730 = vmatpush.msra.mxu0 %v651
    %731 = vmatmul.f32.gmra.mxu0 %v647
    %v732 = vpop.f32.mrf.mxu0
    %v733 = vadd.f32 0.0, %v732
    %734 = vmatmul.f32.gmra.mxu0 %v648
    %v735 = vpop.f32.mrf.mxu0
    %v736 = vadd.f32 0.0, %v735
    %737 = vmatmul.f32.gmra.mxu0 %v649
    %v738 = vpop.f32.mrf.mxu0
    %v739 = vadd.f32 0.0, %v738
    %740 = vmatmul.f32.gmra.mxu0 %v650
    %v741 = vpop.f32.mrf.mxu0
    %v742 = vadd.f32 0.0, %v741
    %743 = vdwg.mxu0
    %744 = vmatpush.msra.mxu0 %v712
    %745 = vmatpush.msra.mxu0 %v708
    %746 = vmatpush.msra.mxu0 %v704
    %747 = vmatpush.msra.mxu0 %v700
    %748 = vmatpush.msra.mxu0 %v696
    %749 = vmatpush.msra.mxu0 %v692
    %750 = vmatpush.msra.mxu0 %v688
    %751 = vmatpush.msra.mxu0 %v684
    %752 = vmatpush.msra.mxu0 %v680
    %753 = vmatpush.msra.mxu0 %v676
    %754 = vmatpush.msra.mxu0 %v672
    %755 = vmatpush.msra.mxu0 %v668
    %756 = vmatpush.msra.mxu0 %v664
    %757 = vmatpush.msra.mxu0 %v660
    %758 = vmatpush.msra.mxu0 %v656
    %759 = vmatpush.msra.mxu0 %v652
    %760 = vmatmul.f32.gmra.mxu0 %v647
    %v761 = vpop.f32.mrf.mxu0
    %v762 = vadd.f32 0.0, %v761
    %763 = vmatmul.f32.gmra.mxu0 %v648
    %v764 = vpop.f32.mrf.mxu0
    %v765 = vadd.f32 0.0, %v764
    %766 = vmatmul.f32.gmra.mxu0 %v649
    %v767 = vpop.f32.mrf.mxu0
    %v768 = vadd.f32 0.0, %v767
    %769 = vmatmul.f32.gmra.mxu0 %v650
    %v770 = vpop.f32.mrf.mxu0
    %v771 = vadd.f32 0.0, %v770
    %772 = vdwg.mxu0
    %773 = vmatpush.msra.mxu0 %v713
    %774 = vmatpush.msra.mxu0 %v709
    %775 = vmatpush.msra.mxu0 %v705
    %776 = vmatpush.msra.mxu0 %v701
    %777 = vmatpush.msra.mxu0 %v697
    %778 = vmatpush.msra.mxu0 %v693
    %779 = vmatpush.msra.mxu0 %v689
    %780 = vmatpush.msra.mxu0 %v685
    %781 = vmatpush.msra.mxu0 %v681
    %782 = vmatpush.msra.mxu0 %v677
    %783 = vmatpush.msra.mxu0 %v673
    %784 = vmatpush.msra.mxu0 %v669
    %785 = vmatpush.msra.mxu0 %v665
    %786 = vmatpush.msra.mxu0 %v661
    %787 = vmatpush.msra.mxu0 %v657
    %788 = vmatpush.msra.mxu0 %v653
    %789 = vmatmul.f32.gmra.mxu0 %v647
    %v790 = vpop.f32.mrf.mxu0
    %v791 = vadd.f32 0.0, %v790
    %792 = vmatmul.f32.gmra.mxu0 %v648
    %v793 = vpop.f32.mrf.mxu0
    %v794 = vadd.f32 0.0, %v793
    %795 = vmatmul.f32.gmra.mxu0 %v649
    %v796 = vpop.f32.mrf.mxu0
    %v797 = vadd.f32 0.0, %v796
    %798 = vmatmul.f32.gmra.mxu0 %v650
    %v799 = vpop.f32.mrf.mxu0
    %v800 = vadd.f32 0.0, %v799
    %801 = vdwg.mxu0
    %802 = vmatpush.msra.mxu0 %v714
    %803 = vmatpush.msra.mxu0 %v710
    %804 = vmatpush.msra.mxu0 %v706
    %805 = vmatpush.msra.mxu0 %v702
    %806 = vmatpush.msra.mxu0 %v698
    %807 = vmatpush.msra.mxu0 %v694
    %808 = vmatpush.msra.mxu0 %v690
    %809 = vmatpush.msra.mxu0 %v686
    %810 = vmatpush.msra.mxu0 %v682
    %811 = vmatpush.msra.mxu0 %v678
    %812 = vmatpush.msra.mxu0 %v674
    %813 = vmatpush.msra.mxu0 %v670
    %814 = vmatpush.msra.mxu0 %v666
    %815 = vmatpush.msra.mxu0 %v662
    %816 = vmatpush.msra.mxu0 %v658
    %817 = vmatpush.msra.mxu0 %v654
    %818 = vmatmul.f32.gmra.mxu0 %v647
    %v819 = vpop.f32.mrf.mxu0
    %v820 = vadd.f32 0.0, %v819
    %821 = vmatmul.f32.gmra.mxu0 %v648
    %v822 = vpop.f32.mrf.mxu0
    %v823 = vadd.f32 0.0, %v822
    %824 = vmatmul.f32.gmra.mxu0 %v649
    %v825 = vpop.f32.mrf.mxu0
    %v826 = vadd.f32 0.0, %v825
    %827 = vmatmul.f32.gmra.mxu0 %v650
    %v828 = vpop.f32.mrf.mxu0
    %v829 = vadd.f32 0.0, %v828
    %830 = vdwg.mxu0
    %831 = vst [vmem:[#allocation3] sm:$0xff] %v733
    %832 = vst [vmem:[#allocation3 + $0x8] sm:$0xff] %v762
    %833 = vst [vmem:[#allocation3 + $0x10] sm:$0xff] %v791
    %834 = vst [vmem:[#allocation3 + $0x18] sm:$0xff] %v820
    %835 = vst [vmem:[#allocation3 + $0x20] sm:$0xff] %v736
    %836 = vst [vmem:[#allocation3 + $0x28] sm:$0xff] %v765
    %837 = vst [vmem:[#allocation3 + $0x30] sm:$0xff] %v794
    %838 = vst [vmem:[#allocation3 + $0x38] sm:$0xff] %v823
    %839 = vst [vmem:[#allocation3 + $0x40] sm:$0xff] %v739
    %840 = vst [vmem:[#allocation3 + $0x48] sm:$0xff] %v768
    %841 = vst [vmem:[#allocation3 + $0x50] sm:$0xff] %v797
    %842 = vst [vmem:[#allocation3 + $0x58] sm:$0xff] %v826
    %843 = vst [vmem:[#allocation3 + $0x60] sm:$0xff] %v742
    %844 = vst [vmem:[#allocation3 + $0x68] sm:$0xff] %v771
    %845 = vst [vmem:[#allocation3 + $0x70] sm:$0xff] %v800
    %846 = vst [vmem:[#allocation3 + $0x78] sm:$0xff] %v829
    %v847 = vld [vmem:[%s10] sm:$0xf]
    %v849 = vperm.slane %v847, 0
    %v850 = vperm.slane %v847, 1
    %v851 = vperm.slane %v847, 2
    %v852 = vperm.slane %v847, 3
    %857 = vst [vmem:[#allocation5] sm:$0xff] 0.0
    %858 = vst [vmem:[#allocation6] sm:$0xff] 0.0
    %859 = vst [vmem:[#allocation7] sm:$0xff] 0.0
    %860 = vst [vmem:[#allocation8] sm:$0xff] 0.0
    loop: start=0, step=1, limit=8
    $region94: #{tpu_custom_call.1} parent=1 // loop_pre_header
      _
    $region95: #{tpu_custom_call.1} parent=1 // loop_header
      %s862 = sphi 0, %s866
      %p863 = scmp.ge.s32.totalorder %s862, 8
    $region96: #{tpu_custom_call.1} parent=1 // loop_header_branch
      %865 = sbr.rel (%p863) target = $region100
    $region97: #{tpu_custom_call.1} parent=1 // loop_body
      %s867 = smul.u32 %s862, 4
      %s868 = smul.addr %s867, 8
      %s869 = scalar_lea.vmem [#allocation2], %s868
      %v870 = vld [vmem:[%s869] sm:$0xff]
      %v871 = vld [vmem:[%s869 + $0x8] sm:$0xff]
      %v872 = vld [vmem:[%s869 + $0x10] sm:$0xff]
      %v873 = vld [vmem:[%s869 + $0x18] sm:$0xff]
      %v874 = vld [vmem:[#allocation5] sm:$0xff]
      %v875 = vld [vmem:[#allocation18] sm:$0xff]
      %v876 = vld [vmem:[#allocation18 + $0x8] sm:$0xff]
      %v877 = vld [vmem:[#allocation18 + $0x10] sm:$0xff]
      %v878 = vld [vmem:[#allocation18 + $0x18] sm:$0xff]
      %v879 = vld [vmem:[#allocation18 + $0x20] sm:$0xff]
      %v880 = vld [vmem:[#allocation18 + $0x28] sm:$0xff]
      %v881 = vld [vmem:[#allocation18 + $0x30] sm:$0xff]
      %v882 = vld [vmem:[#allocation18 + $0x38] sm:$0xff]
      %v883 = vld [vmem:[#allocation18 + $0x40] sm:$0xff]
      %v884 = vld [vmem:[#allocation18 + $0x48] sm:$0xff]
      %v885 = vld [vmem:[#allocation18 + $0x50] sm:$0xff]
      %v886 = vld [vmem:[#allocation18 + $0x58] sm:$0xff]
      %v887 = vld [vmem:[#allocation18 + $0x60] sm:$0xff]
      %v888 = vld [vmem:[#allocation18 + $0x68] sm:$0xff]
      %v889 = vld [vmem:[#allocation18 + $0x70] sm:$0xff]
      %v890 = vld [vmem:[#allocation18 + $0x78] sm:$0xff]
      %v891 = vld [vmem:[#allocation18 + $0x80] sm:$0xff]
      %v892 = vld [vmem:[#allocation18 + $0x88] sm:$0xff]
      %v893 = vld [vmem:[#allocation18 + $0x90] sm:$0xff]
      %v894 = vld [vmem:[#allocation18 + $0x98] sm:$0xff]
      %v895 = vld [vmem:[#allocation18 + $0xa0] sm:$0xff]
      %v896 = vld [vmem:[#allocation18 + $0xa8] sm:$0xff]
      %v897 = vld [vmem:[#allocation18 + $0xb0] sm:$0xff]
      %v898 = vld [vmem:[#allocation18 + $0xb8] sm:$0xff]
      %v899 = vld [vmem:[#allocation18 + $0xc0] sm:$0xff]
      %v900 = vld [vmem:[#allocation18 + $0xc8] sm:$0xff]
      %v901 = vld [vmem:[#allocation18 + $0xd0] sm:$0xff]
      %v902 = vld [vmem:[#allocation18 + $0xd8] sm:$0xff]
      %v903 = vld [vmem:[#allocation18 + $0xe0] sm:$0xff]
      %v904 = vld [vmem:[#allocation18 + $0xe8] sm:$0xff]
      %v905 = vld [vmem:[#allocation18 + $0xf0] sm:$0xff]
      %v906 = vld [vmem:[#allocation18 + $0xf8] sm:$0xff]
      %v907 = vld [vmem:[#allocation18 + $0x100] sm:$0xff]
      %v908 = vld [vmem:[#allocation18 + $0x108] sm:$0xff]
      %v909 = vld [vmem:[#allocation18 + $0x110] sm:$0xff]
      %v910 = vld [vmem:[#allocation18 + $0x118] sm:$0xff]
      %v911 = vld [vmem:[#allocation18 + $0x120] sm:$0xff]
      %v912 = vld [vmem:[#allocation18 + $0x128] sm:$0xff]
      %v913 = vld [vmem:[#allocation18 + $0x130] sm:$0xff]
      %v914 = vld [vmem:[#allocation18 + $0x138] sm:$0xff]
      %v915 = vld [vmem:[#allocation18 + $0x140] sm:$0xff]
      %v916 = vld [vmem:[#allocation18 + $0x148] sm:$0xff]
      %v917 = vld [vmem:[#allocation18 + $0x150] sm:$0xff]
      %v918 = vld [vmem:[#allocation18 + $0x158] sm:$0xff]
      %v919 = vld [vmem:[#allocation18 + $0x160] sm:$0xff]
      %v920 = vld [vmem:[#allocation18 + $0x168] sm:$0xff]
      %v921 = vld [vmem:[#allocation18 + $0x170] sm:$0xff]
      %v922 = vld [vmem:[#allocation18 + $0x178] sm:$0xff]
      %v923 = vld [vmem:[#allocation18 + $0x180] sm:$0xff]
      %v924 = vld [vmem:[#allocation18 + $0x188] sm:$0xff]
      %v925 = vld [vmem:[#allocation18 + $0x190] sm:$0xff]
      %v926 = vld [vmem:[#allocation18 + $0x198] sm:$0xff]
      %v927 = vld [vmem:[#allocation18 + $0x1a0] sm:$0xff]
      %v928 = vld [vmem:[#allocation18 + $0x1a8] sm:$0xff]
      %v929 = vld [vmem:[#allocation18 + $0x1b0] sm:$0xff]
      %v930 = vld [vmem:[#allocation18 + $0x1b8] sm:$0xff]
      %v931 = vld [vmem:[#allocation18 + $0x1c0] sm:$0xff]
      %v932 = vld [vmem:[#allocation18 + $0x1c8] sm:$0xff]
      %v933 = vld [vmem:[#allocation18 + $0x1d0] sm:$0xff]
      %v934 = vld [vmem:[#allocation18 + $0x1d8] sm:$0xff]
      %v935 = vld [vmem:[#allocation18 + $0x1e0] sm:$0xff]
      %v936 = vld [vmem:[#allocation18 + $0x1e8] sm:$0xff]
      %v937 = vld [vmem:[#allocation18 + $0x1f0] sm:$0xff]
      %v938 = vld [vmem:[#allocation18 + $0x1f8] sm:$0xff]
      %939 = vmatpush.msra.mxu0 %v935
      %940 = vmatpush.msra.mxu0 %v931
      %941 = vmatpush.msra.mxu0 %v927
      %942 = vmatpush.msra.mxu0 %v923
      %943 = vmatpush.msra.mxu0 %v919
      %944 = vmatpush.msra.mxu0 %v915
      %945 = vmatpush.msra.mxu0 %v911
      %946 = vmatpush.msra.mxu0 %v907
      %947 = vmatpush.msra.mxu0 %v903
      %948 = vmatpush.msra.mxu0 %v899
      %949 = vmatpush.msra.mxu0 %v895
      %950 = vmatpush.msra.mxu0 %v891
      %951 = vmatpush.msra.mxu0 %v887
      %952 = vmatpush.msra.mxu0 %v883
      %953 = vmatpush.msra.mxu0 %v879
      %954 = vmatpush.msra.mxu0 %v875
      %955 = vmatmul.f32.gmra.mxu0 %v874
      %v956 = vpop.f32.mrf.mxu0
      %v957 = vadd.f32 0.0, %v956
      %958 = vdwg.mxu0
      %959 = vmatpush.msra.mxu0 %v936
      %960 = vmatpush.msra.mxu0 %v932
      %961 = vmatpush.msra.mxu0 %v928
      %962 = vmatpush.msra.mxu0 %v924
      %963 = vmatpush.msra.mxu0 %v920
      %964 = vmatpush.msra.mxu0 %v916
      %965 = vmatpush.msra.mxu0 %v912
      %966 = vmatpush.msra.mxu0 %v908
      %967 = vmatpush.msra.mxu0 %v904
      %968 = vmatpush.msra.mxu0 %v900
      %969 = vmatpush.msra.mxu0 %v896
      %970 = vmatpush.msra.mxu0 %v892
      %971 = vmatpush.msra.mxu0 %v888
      %972 = vmatpush.msra.mxu0 %v884
      %973 = vmatpush.msra.mxu0 %v880
      %974 = vmatpush.msra.mxu0 %v876
      %975 = vmatmul.f32.gmra.mxu0 %v874
      %v976 = vpop.f32.mrf.mxu0
      %v977 = vadd.f32 0.0, %v976
      %978 = vdwg.mxu0
      %979 = vmatpush.msra.mxu0 %v937
      %980 = vmatpush.msra.mxu0 %v933
      %981 = vmatpush.msra.mxu0 %v929
      %982 = vmatpush.msra.mxu0 %v925
      %983 = vmatpush.msra.mxu0 %v921
      %984 = vmatpush.msra.mxu0 %v917
      %985 = vmatpush.msra.mxu0 %v913
      %986 = vmatpush.msra.mxu0 %v909
      %987 = vmatpush.msra.mxu0 %v905
      %988 = vmatpush.msra.mxu0 %v901
      %989 = vmatpush.msra.mxu0 %v897
      %990 = vmatpush.msra.mxu0 %v893
      %991 = vmatpush.msra.mxu0 %v889
      %992 = vmatpush.msra.mxu0 %v885
      %993 = vmatpush.msra.mxu0 %v881
      %994 = vmatpush.msra.mxu0 %v877
      %995 = vmatmul.f32.gmra.mxu0 %v874
      %v996 = vpop.f32.mrf.mxu0
      %v997 = vadd.f32 0.0, %v996
      %998 = vdwg.mxu0
      %999 = vmatpush.msra.mxu0 %v938
      %1000 = vmatpush.msra.mxu0 %v934
      %1001 = vmatpush.msra.mxu0 %v930
      %1002 = vmatpush.msra.mxu0 %v926
      %1003 = vmatpush.msra.mxu0 %v922
      %1004 = vmatpush.msra.mxu0 %v918
      %1005 = vmatpush.msra.mxu0 %v914
      %1006 = vmatpush.msra.mxu0 %v910
      %1007 = vmatpush.msra.mxu0 %v906
      %1008 = vmatpush.msra.mxu0 %v902
      %1009 = vmatpush.msra.mxu0 %v898
      %1010 = vmatpush.msra.mxu0 %v894
      %1011 = vmatpush.msra.mxu0 %v890
      %1012 = vmatpush.msra.mxu0 %v886
      %1013 = vmatpush.msra.mxu0 %v882
      %1014 = vmatpush.msra.mxu0 %v878
      %1015 = vmatmul.f32.gmra.mxu0 %v874
      %v1016 = vpop.f32.mrf.mxu0
      %v1017 = vadd.f32 0.0, %v1016
      %1018 = vdwg.mxu0
      %v1019 = vadd.f32 %v870, %v957
      %v1020 = vadd.f32 %v871, %v977
      %v1021 = vadd.f32 %v872, %v997
      %v1022 = vadd.f32 %v873, %v1017
      %v1023 = vld [vmem:[#allocation6] sm:$0xff]
      %v1024 = vxor.u32 %v1019, 2147483648
      %v1025 = vmul.f32 %v1024, 1.442695
      %v1026 = vpow.pop %v1025
      %v1027 = vadd.f32 %v1026, 1.0
      %v1028 = vrcp.pop %v1027
      %v1029 = vmul.f32 %v1027, %v1028
      %v1030 = vsub.f32 1.0, %v1029
      %v1031 = vmul.f32 %v1028, %v1030
      %v1032 = vadd.f32 %v1028, %v1031
      %vm1033 = vweird.f32 %v1027
      %vm1034 = vweird.f32 %v1028
      %vm1035 = vmor %vm1033, %vm1034
      %v1036 = vsel %vm1035, %v1028, %v1032
      %v1037 = vand.u32 2147483647, %v1027
      %vm1038 = vcmp.eq.f32.partialorder %v1037, 8.507059e+37
      %v1039 = vand.u32 %v1027, 2147483648
      %v1040 = vor.u32 1.1754944e-38, %v1039
      %v1041 = vsel %vm1038, %v1040, %v1036
      %v1042 = vmul.f32 1.0, %v1041
      %v1043 = vxor.u32 %v1020, 2147483648
      %v1044 = vmul.f32 %v1043, 1.442695
      %v1045 = vpow.pop %v1044
      %v1046 = vadd.f32 %v1045, 1.0
      %v1047 = vrcp.pop %v1046
      %v1048 = vmul.f32 %v1046, %v1047
      %v1049 = vsub.f32 1.0, %v1048
      %v1050 = vmul.f32 %v1047, %v1049
      %v1051 = vadd.f32 %v1047, %v1050
      %vm1052 = vweird.f32 %v1046
      %vm1053 = vweird.f32 %v1047
      %vm1054 = vmor %vm1052, %vm1053
      %v1055 = vsel %vm1054, %v1047, %v1051
      %v1056 = vand.u32 2147483647, %v1046
      %vm1057 = vcmp.eq.f32.partialorder %v1056, 8.507059e+37
      %v1058 = vand.u32 %v1046, 2147483648
      %v1059 = vor.u32 1.1754944e-38, %v1058
      %v1060 = vsel %vm1057, %v1059, %v1055
      %v1061 = vmul.f32 1.0, %v1060
      %v1062 = vtanh.pop %v1021
      %v1063 = vxor.u32 %v1022, 2147483648
      %v1064 = vmul.f32 %v1063, 1.442695
      %v1065 = vpow.pop %v1064
      %v1066 = vadd.f32 %v1065, 1.0
      %v1067 = vrcp.pop %v1066
      %v1068 = vmul.f32 %v1066, %v1067
      %v1069 = vsub.f32 1.0, %v1068
      %v1070 = vmul.f32 %v1067, %v1069
      %v1071 = vadd.f32 %v1067, %v1070
      %vm1072 = vweird.f32 %v1066
      %vm1073 = vweird.f32 %v1067
      %vm1074 = vmor %vm1072, %vm1073
      %v1075 = vsel %vm1074, %v1067, %v1071
      %v1076 = vand.u32 2147483647, %v1066
      %vm1077 = vcmp.eq.f32.partialorder %v1076, 8.507059e+37
      %v1078 = vand.u32 %v1066, 2147483648
      %v1079 = vor.u32 1.1754944e-38, %v1078
      %v1080 = vsel %vm1077, %v1079, %v1075
      %v1081 = vmul.f32 1.0, %v1080
      %v1082 = vmul.f32 %v1061, %v1023
      %v1083 = vmul.f32 %v1042, %v1062
      %v1084 = vadd.f32 %v1082, %v1083
      %v1085 = vtanh.pop %v1084
      %v1086 = vmul.f32 %v1081, %v1085
      %1087 = vst [vmem:[#allocation5] sm:$0xff] %v1086
      %1088 = vst [vmem:[#allocation6] sm:$0xff] %v1084
      %v1089 = vld [vmem:[#allocation20] sm:$0xff]
      %v1090 = vld [vmem:[#allocation20 + $0x8] sm:$0xff]
      %v1091 = vld [vmem:[#allocation20 + $0x10] sm:$0xff]
      %v1092 = vld [vmem:[#allocation20 + $0x18] sm:$0xff]
      %v1093 = vld [vmem:[#allocation20 + $0x20] sm:$0xff]
      %v1094 = vld [vmem:[#allocation20 + $0x28] sm:$0xff]
      %v1095 = vld [vmem:[#allocation20 + $0x30] sm:$0xff]
      %v1096 = vld [vmem:[#allocation20 + $0x38] sm:$0xff]
      %v1097 = vld [vmem:[#allocation20 + $0x40] sm:$0xff]
      %v1098 = vld [vmem:[#allocation20 + $0x48] sm:$0xff]
      %v1099 = vld [vmem:[#allocation20 + $0x50] sm:$0xff]
      %v1100 = vld [vmem:[#allocation20 + $0x58] sm:$0xff]
      %v1101 = vld [vmem:[#allocation20 + $0x60] sm:$0xff]
      %v1102 = vld [vmem:[#allocation20 + $0x68] sm:$0xff]
      %v1103 = vld [vmem:[#allocation20 + $0x70] sm:$0xff]
      %v1104 = vld [vmem:[#allocation20 + $0x78] sm:$0xff]
      %v1105 = vld [vmem:[#allocation20 + $0x80] sm:$0xff]
      %v1106 = vld [vmem:[#allocation20 + $0x88] sm:$0xff]
      %v1107 = vld [vmem:[#allocation20 + $0x90] sm:$0xff]
      %v1108 = vld [vmem:[#allocation20 + $0x98] sm:$0xff]
      %v1109 = vld [vmem:[#allocation20 + $0xa0] sm:$0xff]
      %v1110 = vld [vmem:[#allocation20 + $0xa8] sm:$0xff]
      %v1111 = vld [vmem:[#allocation20 + $0xb0] sm:$0xff]
      %v1112 = vld [vmem:[#allocation20 + $0xb8] sm:$0xff]
      %v1113 = vld [vmem:[#allocation20 + $0xc0] sm:$0xff]
      %v1114 = vld [vmem:[#allocation20 + $0xc8] sm:$0xff]
      %v1115 = vld [vmem:[#allocation20 + $0xd0] sm:$0xff]
      %v1116 = vld [vmem:[#allocation20 + $0xd8] sm:$0xff]
      %v1117 = vld [vmem:[#allocation20 + $0xe0] sm:$0xff]
      %v1118 = vld [vmem:[#allocation20 + $0xe8] sm:$0xff]
      %v1119 = vld [vmem:[#allocation20 + $0xf0] sm:$0xff]
      %v1120 = vld [vmem:[#allocation20 + $0xf8] sm:$0xff]
      %v1121 = vld [vmem:[#allocation20 + $0x100] sm:$0xff]
      %v1122 = vld [vmem:[#allocation20 + $0x108] sm:$0xff]
      %v1123 = vld [vmem:[#allocation20 + $0x110] sm:$0xff]
      %v1124 = vld [vmem:[#allocation20 + $0x118] sm:$0xff]
      %v1125 = vld [vmem:[#allocation20 + $0x120] sm:$0xff]
      %v1126 = vld [vmem:[#allocation20 + $0x128] sm:$0xff]
      %v1127 = vld [vmem:[#allocation20 + $0x130] sm:$0xff]
      %v1128 = vld [vmem:[#allocation20 + $0x138] sm:$0xff]
      %v1129 = vld [vmem:[#allocation20 + $0x140] sm:$0xff]
      %v1130 = vld [vmem:[#allocation20 + $0x148] sm:$0xff]
      %v1131 = vld [vmem:[#allocation20 + $0x150] sm:$0xff]
      %v1132 = vld [vmem:[#allocation20 + $0x158] sm:$0xff]
      %v1133 = vld [vmem:[#allocation20 + $0x160] sm:$0xff]
      %v1134 = vld [vmem:[#allocation20 + $0x168] sm:$0xff]
      %v1135 = vld [vmem:[#allocation20 + $0x170] sm:$0xff]
      %v1136 = vld [vmem:[#allocation20 + $0x178] sm:$0xff]
      %v1137 = vld [vmem:[#allocation20 + $0x180] sm:$0xff]
      %v1138 = vld [vmem:[#allocation20 + $0x188] sm:$0xff]
      %v1139 = vld [vmem:[#allocation20 + $0x190] sm:$0xff]
      %v1140 = vld [vmem:[#allocation20 + $0x198] sm:$0xff]
      %v1141 = vld [vmem:[#allocation20 + $0x1a0] sm:$0xff]
      %v1142 = vld [vmem:[#allocation20 + $0x1a8] sm:$0xff]
      %v1143 = vld [vmem:[#allocation20 + $0x1b0] sm:$0xff]
      %v1144 = vld [vmem:[#allocation20 + $0x1b8] sm:$0xff]
      %v1145 = vld [vmem:[#allocation20 + $0x1c0] sm:$0xff]
      %v1146 = vld [vmem:[#allocation20 + $0x1c8] sm:$0xff]
      %v1147 = vld [vmem:[#allocation20 + $0x1d0] sm:$0xff]
      %v1148 = vld [vmem:[#allocation20 + $0x1d8] sm:$0xff]
      %v1149 = vld [vmem:[#allocation20 + $0x1e0] sm:$0xff]
      %v1150 = vld [vmem:[#allocation20 + $0x1e8] sm:$0xff]
      %v1151 = vld [vmem:[#allocation20 + $0x1f0] sm:$0xff]
      %v1152 = vld [vmem:[#allocation20 + $0x1f8] sm:$0xff]
      %v1153 = vld [vmem:[#allocation7] sm:$0xff]
      %v1154 = vld [vmem:[#allocation23] sm:$0xff]
      %v1155 = vld [vmem:[#allocation23 + $0x8] sm:$0xff]
      %v1156 = vld [vmem:[#allocation23 + $0x10] sm:$0xff]
      %v1157 = vld [vmem:[#allocation23 + $0x18] sm:$0xff]
      %v1158 = vld [vmem:[#allocation23 + $0x20] sm:$0xff]
      %v1159 = vld [vmem:[#allocation23 + $0x28] sm:$0xff]
      %v1160 = vld [vmem:[#allocation23 + $0x30] sm:$0xff]
      %v1161 = vld [vmem:[#allocation23 + $0x38] sm:$0xff]
      %v1162 = vld [vmem:[#allocation23 + $0x40] sm:$0xff]
      %v1163 = vld [vmem:[#allocation23 + $0x48] sm:$0xff]
      %v1164 = vld [vmem:[#allocation23 + $0x50] sm:$0xff]
      %v1165 = vld [vmem:[#allocation23 + $0x58] sm:$0xff]
      %v1166 = vld [vmem:[#allocation23 + $0x60] sm:$0xff]
      %v1167 = vld [vmem:[#allocation23 + $0x68] sm:$0xff]
      %v1168 = vld [vmem:[#allocation23 + $0x70] sm:$0xff]
      %v1169 = vld [vmem:[#allocation23 + $0x78] sm:$0xff]
      %v1170 = vld [vmem:[#allocation23 + $0x80] sm:$0xff]
      %v1171 = vld [vmem:[#allocation23 + $0x88] sm:$0xff]
      %v1172 = vld [vmem:[#allocation23 + $0x90] sm:$0xff]
      %v1173 = vld [vmem:[#allocation23 + $0x98] sm:$0xff]
      %v1174 = vld [vmem:[#allocation23 + $0xa0] sm:$0xff]
      %v1175 = vld [vmem:[#allocation23 + $0xa8] sm:$0xff]
      %v1176 = vld [vmem:[#allocation23 + $0xb0] sm:$0xff]
      %v1177 = vld [vmem:[#allocation23 + $0xb8] sm:$0xff]
      %v1178 = vld [vmem:[#allocation23 + $0xc0] sm:$0xff]
      %v1179 = vld [vmem:[#allocation23 + $0xc8] sm:$0xff]
      %v1180 = vld [vmem:[#allocation23 + $0xd0] sm:$0xff]
      %v1181 = vld [vmem:[#allocation23 + $0xd8] sm:$0xff]
      %v1182 = vld [vmem:[#allocation23 + $0xe0] sm:$0xff]
      %v1183 = vld [vmem:[#allocation23 + $0xe8] sm:$0xff]
      %v1184 = vld [vmem:[#allocation23 + $0xf0] sm:$0xff]
      %v1185 = vld [vmem:[#allocation23 + $0xf8] sm:$0xff]
      %v1186 = vld [vmem:[#allocation23 + $0x100] sm:$0xff]
      %v1187 = vld [vmem:[#allocation23 + $0x108] sm:$0xff]
      %v1188 = vld [vmem:[#allocation23 + $0x110] sm:$0xff]
      %v1189 = vld [vmem:[#allocation23 + $0x118] sm:$0xff]
      %v1190 = vld [vmem:[#allocation23 + $0x120] sm:$0xff]
      %v1191 = vld [vmem:[#allocation23 + $0x128] sm:$0xff]
      %v1192 = vld [vmem:[#allocation23 + $0x130] sm:$0xff]
      %v1193 = vld [vmem:[#allocation23 + $0x138] sm:$0xff]
      %v1194 = vld [vmem:[#allocation23 + $0x140] sm:$0xff]
      %v1195 = vld [vmem:[#allocation23 + $0x148] sm:$0xff]
      %v1196 = vld [vmem:[#allocation23 + $0x150] sm:$0xff]
      %v1197 = vld [vmem:[#allocation23 + $0x158] sm:$0xff]
      %v1198 = vld [vmem:[#allocation23 + $0x160] sm:$0xff]
      %v1199 = vld [vmem:[#allocation23 + $0x168] sm:$0xff]
      %v1200 = vld [vmem:[#allocation23 + $0x170] sm:$0xff]
      %v1201 = vld [vmem:[#allocation23 + $0x178] sm:$0xff]
      %v1202 = vld [vmem:[#allocation23 + $0x180] sm:$0xff]
      %v1203 = vld [vmem:[#allocation23 + $0x188] sm:$0xff]
      %v1204 = vld [vmem:[#allocation23 + $0x190] sm:$0xff]
      %v1205 = vld [vmem:[#allocation23 + $0x198] sm:$0xff]
      %v1206 = vld [vmem:[#allocation23 + $0x1a0] sm:$0xff]
      %v1207 = vld [vmem:[#allocation23 + $0x1a8] sm:$0xff]
      %v1208 = vld [vmem:[#allocation23 + $0x1b0] sm:$0xff]
      %v1209 = vld [vmem:[#allocation23 + $0x1b8] sm:$0xff]
      %v1210 = vld [vmem:[#allocation23 + $0x1c0] sm:$0xff]
      %v1211 = vld [vmem:[#allocation23 + $0x1c8] sm:$0xff]
      %v1212 = vld [vmem:[#allocation23 + $0x1d0] sm:$0xff]
      %v1213 = vld [vmem:[#allocation23 + $0x1d8] sm:$0xff]
      %v1214 = vld [vmem:[#allocation23 + $0x1e0] sm:$0xff]
      %v1215 = vld [vmem:[#allocation23 + $0x1e8] sm:$0xff]
      %v1216 = vld [vmem:[#allocation23 + $0x1f0] sm:$0xff]
      %v1217 = vld [vmem:[#allocation23 + $0x1f8] sm:$0xff]
      %1218 = vmatpush.msra.mxu0 %v1214
      %1219 = vmatpush.msra.mxu0 %v1210
      %1220 = vmatpush.msra.mxu0 %v1206
      %1221 = vmatpush.msra.mxu0 %v1202
      %1222 = vmatpush.msra.mxu0 %v1198
      %1223 = vmatpush.msra.mxu0 %v1194
      %1224 = vmatpush.msra.mxu0 %v1190
      %1225 = vmatpush.msra.mxu0 %v1186
      %1226 = vmatpush.msra.mxu0 %v1182
      %1227 = vmatpush.msra.mxu0 %v1178
      %1228 = vmatpush.msra.mxu0 %v1174
      %1229 = vmatpush.msra.mxu0 %v1170
      %1230 = vmatpush.msra.mxu0 %v1166
      %1231 = vmatpush.msra.mxu0 %v1162
      %1232 = vmatpush.msra.mxu0 %v1158
      %1233 = vmatpush.msra.mxu0 %v1154
      %1234 = vmatmul.f32.gmra.mxu0 %v1153
      %v1235 = vpop.f32.mrf.mxu0
      %v1236 = vadd.f32 0.0, %v1235
      %1237 = vdwg.mxu0
      %1238 = vmatpush.msra.mxu0 %v1215
      %1239 = vmatpush.msra.mxu0 %v1211
      %1240 = vmatpush.msra.mxu0 %v1207
      %1241 = vmatpush.msra.mxu0 %v1203
      %1242 = vmatpush.msra.mxu0 %v1199
      %1243 = vmatpush.msra.mxu0 %v1195
      %1244 = vmatpush.msra.mxu0 %v1191
      %1245 = vmatpush.msra.mxu0 %v1187
      %1246 = vmatpush.msra.mxu0 %v1183
      %1247 = vmatpush.msra.mxu0 %v1179
      %1248 = vmatpush.msra.mxu0 %v1175
      %1249 = vmatpush.msra.mxu0 %v1171
      %1250 = vmatpush.msra.mxu0 %v1167
      %1251 = vmatpush.msra.mxu0 %v1163
      %1252 = vmatpush.msra.mxu0 %v1159
      %1253 = vmatpush.msra.mxu0 %v1155
      %1254 = vmatmul.f32.gmra.mxu0 %v1153
      %v1255 = vpop.f32.mrf.mxu0
      %v1256 = vadd.f32 0.0, %v1255
      %1257 = vdwg.mxu0
      %1258 = vmatpush.msra.mxu0 %v1216
      %1259 = vmatpush.msra.mxu0 %v1212
      %1260 = vmatpush.msra.mxu0 %v1208
      %1261 = vmatpush.msra.mxu0 %v1204
      %1262 = vmatpush.msra.mxu0 %v1200
      %1263 = vmatpush.msra.mxu0 %v1196
      %1264 = vmatpush.msra.mxu0 %v1192
      %1265 = vmatpush.msra.mxu0 %v1188
      %1266 = vmatpush.msra.mxu0 %v1184
      %1267 = vmatpush.msra.mxu0 %v1180
      %1268 = vmatpush.msra.mxu0 %v1176
      %1269 = vmatpush.msra.mxu0 %v1172
      %1270 = vmatpush.msra.mxu0 %v1168
      %1271 = vmatpush.msra.mxu0 %v1164
      %1272 = vmatpush.msra.mxu0 %v1160
      %1273 = vmatpush.msra.mxu0 %v1156
      %1274 = vmatmul.f32.gmra.mxu0 %v1153
      %v1275 = vpop.f32.mrf.mxu0
      %v1276 = vadd.f32 0.0, %v1275
      %1277 = vdwg.mxu0
      %1278 = vmatpush.msra.mxu0 %v1217
      %1279 = vmatpush.msra.mxu0 %v1213
      %1280 = vmatpush.msra.mxu0 %v1209
      %1281 = vmatpush.msra.mxu0 %v1205
      %1282 = vmatpush.msra.mxu0 %v1201
      %1283 = vmatpush.msra.mxu0 %v1197
      %1284 = vmatpush.msra.mxu0 %v1193
      %1285 = vmatpush.msra.mxu0 %v1189
      %1286 = vmatpush.msra.mxu0 %v1185
      %1287 = vmatpush.msra.mxu0 %v1181
      %1288 = vmatpush.msra.mxu0 %v1177
      %1289 = vmatpush.msra.mxu0 %v1173
      %1290 = vmatpush.msra.mxu0 %v1169
      %1291 = vmatpush.msra.mxu0 %v1165
      %1292 = vmatpush.msra.mxu0 %v1161
      %1293 = vmatpush.msra.mxu0 %v1157
      %1294 = vmatmul.f32.gmra.mxu0 %v1153
      %v1295 = vpop.f32.mrf.mxu0
      %v1296 = vadd.f32 0.0, %v1295
      %1297 = vdwg.mxu0
      %1298 = vmatpush.msra.mxu0 %v1149
      %1299 = vmatpush.msra.mxu0 %v1145
      %1300 = vmatpush.msra.mxu0 %v1141
      %1301 = vmatpush.msra.mxu0 %v1137
      %1302 = vmatpush.msra.mxu0 %v1133
      %1303 = vmatpush.msra.mxu0 %v1129
      %1304 = vmatpush.msra.mxu0 %v1125
      %1305 = vmatpush.msra.mxu0 %v1121
      %1306 = vmatpush.msra.mxu0 %v1117
      %1307 = vmatpush.msra.mxu0 %v1113
      %1308 = vmatpush.msra.mxu0 %v1109
      %1309 = vmatpush.msra.mxu0 %v1105
      %1310 = vmatpush.msra.mxu0 %v1101
      %1311 = vmatpush.msra.mxu0 %v1097
      %1312 = vmatpush.msra.mxu0 %v1093
      %1313 = vmatpush.msra.mxu0 %v1089
      %1314 = vmatmul.f32.gmra.mxu0 %v1086
      %v1315 = vpop.f32.mrf.mxu0
      %v1316 = vadd.f32 %v1236, %v1315
      %1317 = vdwg.mxu0
      %1318 = vmatpush.msra.mxu0 %v1150
      %1319 = vmatpush.msra.mxu0 %v1146
      %1320 = vmatpush.msra.mxu0 %v1142
      %1321 = vmatpush.msra.mxu0 %v1138
      %1322 = vmatpush.msra.mxu0 %v1134
      %1323 = vmatpush.msra.mxu0 %v1130
      %1324 = vmatpush.msra.mxu0 %v1126
      %1325 = vmatpush.msra.mxu0 %v1122
      %1326 = vmatpush.msra.mxu0 %v1118
      %1327 = vmatpush.msra.mxu0 %v1114
      %1328 = vmatpush.msra.mxu0 %v1110
      %1329 = vmatpush.msra.mxu0 %v1106
      %1330 = vmatpush.msra.mxu0 %v1102
      %1331 = vmatpush.msra.mxu0 %v1098
      %1332 = vmatpush.msra.mxu0 %v1094
      %1333 = vmatpush.msra.mxu0 %v1090
      %1334 = vmatmul.f32.gmra.mxu0 %v1086
      %v1335 = vpop.f32.mrf.mxu0
      %v1336 = vadd.f32 %v1256, %v1335
      %1337 = vdwg.mxu0
      %1338 = vmatpush.msra.mxu0 %v1151
      %1339 = vmatpush.msra.mxu0 %v1147
      %1340 = vmatpush.msra.mxu0 %v1143
      %1341 = vmatpush.msra.mxu0 %v1139
      %1342 = vmatpush.msra.mxu0 %v1135
      %1343 = vmatpush.msra.mxu0 %v1131
      %1344 = vmatpush.msra.mxu0 %v1127
      %1345 = vmatpush.msra.mxu0 %v1123
      %1346 = vmatpush.msra.mxu0 %v1119
      %1347 = vmatpush.msra.mxu0 %v1115
      %1348 = vmatpush.msra.mxu0 %v1111
      %1349 = vmatpush.msra.mxu0 %v1107
      %1350 = vmatpush.msra.mxu0 %v1103
      %1351 = vmatpush.msra.mxu0 %v1099
      %1352 = vmatpush.msra.mxu0 %v1095
      %1353 = vmatpush.msra.mxu0 %v1091
      %1354 = vmatmul.f32.gmra.mxu0 %v1086
      %v1355 = vpop.f32.mrf.mxu0
      %v1356 = vadd.f32 %v1276, %v1355
      %1357 = vdwg.mxu0
      %1358 = vmatpush.msra.mxu0 %v1152
      %1359 = vmatpush.msra.mxu0 %v1148
      %1360 = vmatpush.msra.mxu0 %v1144
      %1361 = vmatpush.msra.mxu0 %v1140
      %1362 = vmatpush.msra.mxu0 %v1136
      %1363 = vmatpush.msra.mxu0 %v1132
      %1364 = vmatpush.msra.mxu0 %v1128
      %1365 = vmatpush.msra.mxu0 %v1124
      %1366 = vmatpush.msra.mxu0 %v1120
      %1367 = vmatpush.msra.mxu0 %v1116
      %1368 = vmatpush.msra.mxu0 %v1112
      %1369 = vmatpush.msra.mxu0 %v1108
      %1370 = vmatpush.msra.mxu0 %v1104
      %1371 = vmatpush.msra.mxu0 %v1100
      %1372 = vmatpush.msra.mxu0 %v1096
      %1373 = vmatpush.msra.mxu0 %v1092
      %1374 = vmatmul.f32.gmra.mxu0 %v1086
      %v1375 = vpop.f32.mrf.mxu0
      %v1376 = vadd.f32 %v1296, %v1375
      %1377 = vdwg.mxu0
      %v1378 = vadd.f32 %v1316, %v849
      %v1379 = vadd.f32 %v1336, %v850
      %v1380 = vadd.f32 %v1356, %v851
      %v1381 = vadd.f32 %v1376, %v852
      %v1382 = vadd.f32 %v1378, 0.0
      %v1383 = vadd.f32 %v1379, 0.0
      %v1384 = vadd.f32 %v1380, 0.0
      %v1385 = vadd.f32 %v1381, 0.0
      %v1386 = vld [vmem:[#allocation8] sm:$0xff]
      %v1387 = vxor.u32 %v1382, 2147483648
      %v1388 = vmul.f32 %v1387, 1.442695
      %v1389 = vpow.pop %v1388
      %v1390 = vadd.f32 %v1389, 1.0
      %v1391 = vrcp.pop %v1390
      %v1392 = vmul.f32 %v1390, %v1391
      %v1393 = vsub.f32 1.0, %v1392
      %v1394 = vmul.f32 %v1391, %v1393
      %v1395 = vadd.f32 %v1391, %v1394
      %vm1396 = vweird.f32 %v1390
      %vm1397 = vweird.f32 %v1391
      %vm1398 = vmor %vm1396, %vm1397
      %v1399 = vsel %vm1398, %v1391, %v1395
      %v1400 = vand.u32 2147483647, %v1390
      %vm1401 = vcmp.eq.f32.partialorder %v1400, 8.507059e+37
      %v1402 = vand.u32 %v1390, 2147483648
      %v1403 = vor.u32 1.1754944e-38, %v1402
      %v1404 = vsel %vm1401, %v1403, %v1399
      %v1405 = vmul.f32 1.0, %v1404
      %v1406 = vxor.u32 %v1383, 2147483648
      %v1407 = vmul.f32 %v1406, 1.442695
      %v1408 = vpow.pop %v1407
      %v1409 = vadd.f32 %v1408, 1.0
      %v1410 = vrcp.pop %v1409
      %v1411 = vmul.f32 %v1409, %v1410
      %v1412 = vsub.f32 1.0, %v1411
      %v1413 = vmul.f32 %v1410, %v1412
      %v1414 = vadd.f32 %v1410, %v1413
      %vm1415 = vweird.f32 %v1409
      %vm1416 = vweird.f32 %v1410
      %vm1417 = vmor %vm1415, %vm1416
      %v1418 = vsel %vm1417, %v1410, %v1414
      %v1419 = vand.u32 2147483647, %v1409
      %vm1420 = vcmp.eq.f32.partialorder %v1419, 8.507059e+37
      %v1421 = vand.u32 %v1409, 2147483648
      %v1422 = vor.u32 1.1754944e-38, %v1421
      %v1423 = vsel %vm1420, %v1422, %v1418
      %v1424 = vmul.f32 1.0, %v1423
      %v1425 = vtanh.pop %v1384
      %v1426 = vxor.u32 %v1385, 2147483648
      %v1427 = vmul.f32 %v1426, 1.442695
      %v1428 = vpow.pop %v1427
      %v1429 = vadd.f32 %v1428, 1.0
      %v1430 = vrcp.pop %v1429
      %v1431 = vmul.f32 %v1429, %v1430
      %v1432 = vsub.f32 1.0, %v1431
      %v1433 = vmul.f32 %v1430, %v1432
      %v1434 = vadd.f32 %v1430, %v1433
      %vm1435 = vweird.f32 %v1429
      %vm1436 = vweird.f32 %v1430
      %vm1437 = vmor %vm1435, %vm1436
      %v1438 = vsel %vm1437, %v1430, %v1434
      %v1439 = vand.u32 2147483647, %v1429
      %vm1440 = vcmp.eq.f32.partialorder %v1439, 8.507059e+37
      %v1441 = vand.u32 %v1429, 2147483648
      %v1442 = vor.u32 1.1754944e-38, %v1441
      %v1443 = vsel %vm1440, %v1442, %v1438
      %v1444 = vmul.f32 1.0, %v1443
      %v1445 = vmul.f32 %v1424, %v1386
      %v1446 = vmul.f32 %v1405, %v1425
      %v1447 = vadd.f32 %v1445, %v1446
      %v1448 = vtanh.pop %v1447
      %v1449 = vmul.f32 %v1444, %v1448
      %1450 = vst [vmem:[#allocation7] sm:$0xff] %v1449
      %1451 = vst [vmem:[#allocation8] sm:$0xff] %v1447
    $region98: #{tpu_custom_call.1} parent=1 // loop_footer
      %s866 = sadd.s32 1, %s862
    $region99: #{tpu_custom_call.1} parent=1 // loop_footer_branch
      %861 = sbr.rel target = $region95
    $region100: #{tpu_custom_call.1} parent=1 // loop_exit
      _
    loop: start=0, step=1, limit=4
    $region101: #{tpu_custom_call.1} parent=1 // loop_pre_header
      _
    $region102: #{tpu_custom_call.1} parent=1 // loop_header
      %s1453 = sphi 0, %s1457
      %p1454 = scmp.ge.s32.totalorder %s1453, 4
    $region103: #{tpu_custom_call.1} parent=1 // loop_header_branch
      %1456 = sbr.rel (%p1454) target = $region107
    $region104: #{tpu_custom_call.1} parent=1 // loop_body
      %s1458 = sadd.s32 %s1453, 8
      %s1459 = smul.u32 %s1453, 4
      %s1460 = smul.addr %s1459, 8
      %s1461 = scalar_lea.vmem [#allocation3], %s1460
      %v1462 = vld [vmem:[%s1461] sm:$0xff]
      %v1463 = vld [vmem:[%s1461 + $0x8] sm:$0xff]
      %v1464 = vld [vmem:[%s1461 + $0x10] sm:$0xff]
      %v1465 = vld [vmem:[%s1461 + $0x18] sm:$0xff]
      %s1466 = smul.u32 %s1458, 4
      %s1467 = smul.addr %s1466, 8
      %s1468 = scalar_lea.vmem [#allocation2], %s1467
      %v1469 = vld [vmem:[%s1468] sm:$0xff]
      %v1470 = vld [vmem:[%s1468 + $0x8] sm:$0xff]
      %v1471 = vld [vmem:[%s1468 + $0x10] sm:$0xff]
      %v1472 = vld [vmem:[%s1468 + $0x18] sm:$0xff]
      %v1473 = vld [vmem:[#allocation5] sm:$0xff]
      %v1474 = vld [vmem:[#allocation18] sm:$0xff]
      %v1475 = vld [vmem:[#allocation18 + $0x8] sm:$0xff]
      %v1476 = vld [vmem:[#allocation18 + $0x10] sm:$0xff]
      %v1477 = vld [vmem:[#allocation18 + $0x18] sm:$0xff]
      %v1478 = vld [vmem:[#allocation18 + $0x20] sm:$0xff]
      %v1479 = vld [vmem:[#allocation18 + $0x28] sm:$0xff]
      %v1480 = vld [vmem:[#allocation18 + $0x30] sm:$0xff]
      %v1481 = vld [vmem:[#allocation18 + $0x38] sm:$0xff]
      %v1482 = vld [vmem:[#allocation18 + $0x40] sm:$0xff]
      %v1483 = vld [vmem:[#allocation18 + $0x48] sm:$0xff]
      %v1484 = vld [vmem:[#allocation18 + $0x50] sm:$0xff]
      %v1485 = vld [vmem:[#allocation18 + $0x58] sm:$0xff]
      %v1486 = vld [vmem:[#allocation18 + $0x60] sm:$0xff]
      %v1487 = vld [vmem:[#allocation18 + $0x68] sm:$0xff]
      %v1488 = vld [vmem:[#allocation18 + $0x70] sm:$0xff]
      %v1489 = vld [vmem:[#allocation18 + $0x78] sm:$0xff]
      %v1490 = vld [vmem:[#allocation18 + $0x80] sm:$0xff]
      %v1491 = vld [vmem:[#allocation18 + $0x88] sm:$0xff]
      %v1492 = vld [vmem:[#allocation18 + $0x90] sm:$0xff]
      %v1493 = vld [vmem:[#allocation18 + $0x98] sm:$0xff]
      %v1494 = vld [vmem:[#allocation18 + $0xa0] sm:$0xff]
      %v1495 = vld [vmem:[#allocation18 + $0xa8] sm:$0xff]
      %v1496 = vld [vmem:[#allocation18 + $0xb0] sm:$0xff]
      %v1497 = vld [vmem:[#allocation18 + $0xb8] sm:$0xff]
      %v1498 = vld [vmem:[#allocation18 + $0xc0] sm:$0xff]
      %v1499 = vld [vmem:[#allocation18 + $0xc8] sm:$0xff]
      %v1500 = vld [vmem:[#allocation18 + $0xd0] sm:$0xff]
      %v1501 = vld [vmem:[#allocation18 + $0xd8] sm:$0xff]
      %v1502 = vld [vmem:[#allocation18 + $0xe0] sm:$0xff]
      %v1503 = vld [vmem:[#allocation18 + $0xe8] sm:$0xff]
      %v1504 = vld [vmem:[#allocation18 + $0xf0] sm:$0xff]
      %v1505 = vld [vmem:[#allocation18 + $0xf8] sm:$0xff]
      %v1506 = vld [vmem:[#allocation18 + $0x100] sm:$0xff]
      %v1507 = vld [vmem:[#allocation18 + $0x108] sm:$0xff]
      %v1508 = vld [vmem:[#allocation18 + $0x110] sm:$0xff]
      %v1509 = vld [vmem:[#allocation18 + $0x118] sm:$0xff]
      %v1510 = vld [vmem:[#allocation18 + $0x120] sm:$0xff]
      %v1511 = vld [vmem:[#allocation18 + $0x128] sm:$0xff]
      %v1512 = vld [vmem:[#allocation18 + $0x130] sm:$0xff]
      %v1513 = vld [vmem:[#allocation18 + $0x138] sm:$0xff]
      %v1514 = vld [vmem:[#allocation18 + $0x140] sm:$0xff]
      %v1515 = vld [vmem:[#allocation18 + $0x148] sm:$0xff]
      %v1516 = vld [vmem:[#allocation18 + $0x150] sm:$0xff]
      %v1517 = vld [vmem:[#allocation18 + $0x158] sm:$0xff]
      %v1518 = vld [vmem:[#allocation18 + $0x160] sm:$0xff]
      %v1519 = vld [vmem:[#allocation18 + $0x168] sm:$0xff]
      %v1520 = vld [vmem:[#allocation18 + $0x170] sm:$0xff]
      %v1521 = vld [vmem:[#allocation18 + $0x178] sm:$0xff]
      %v1522 = vld [vmem:[#allocation18 + $0x180] sm:$0xff]
      %v1523 = vld [vmem:[#allocation18 + $0x188] sm:$0xff]
      %v1524 = vld [vmem:[#allocation18 + $0x190] sm:$0xff]
      %v1525 = vld [vmem:[#allocation18 + $0x198] sm:$0xff]
      %v1526 = vld [vmem:[#allocation18 + $0x1a0] sm:$0xff]
      %v1527 = vld [vmem:[#allocation18 + $0x1a8] sm:$0xff]
      %v1528 = vld [vmem:[#allocation18 + $0x1b0] sm:$0xff]
      %v1529 = vld [vmem:[#allocation18 + $0x1b8] sm:$0xff]
      %v1530 = vld [vmem:[#allocation18 + $0x1c0] sm:$0xff]
      %v1531 = vld [vmem:[#allocation18 + $0x1c8] sm:$0xff]
      %v1532 = vld [vmem:[#allocation18 + $0x1d0] sm:$0xff]
      %v1533 = vld [vmem:[#allocation18 + $0x1d8] sm:$0xff]
      %v1534 = vld [vmem:[#allocation18 + $0x1e0] sm:$0xff]
      %v1535 = vld [vmem:[#allocation18 + $0x1e8] sm:$0xff]
      %v1536 = vld [vmem:[#allocation18 + $0x1f0] sm:$0xff]
      %v1537 = vld [vmem:[#allocation18 + $0x1f8] sm:$0xff]
      %1538 = vmatpush.msra.mxu0 %v1534
      %1539 = vmatpush.msra.mxu0 %v1530
      %1540 = vmatpush.msra.mxu0 %v1526
      %1541 = vmatpush.msra.mxu0 %v1522
      %1542 = vmatpush.msra.mxu0 %v1518
      %1543 = vmatpush.msra.mxu0 %v1514
      %1544 = vmatpush.msra.mxu0 %v1510
      %1545 = vmatpush.msra.mxu0 %v1506
      %1546 = vmatpush.msra.mxu0 %v1502
      %1547 = vmatpush.msra.mxu0 %v1498
      %1548 = vmatpush.msra.mxu0 %v1494
      %1549 = vmatpush.msra.mxu0 %v1490
      %1550 = vmatpush.msra.mxu0 %v1486
      %1551 = vmatpush.msra.mxu0 %v1482
      %1552 = vmatpush.msra.mxu0 %v1478
      %1553 = vmatpush.msra.mxu0 %v1474
      %1554 = vmatmul.f32.gmra.mxu0 %v1473
      %v1555 = vpop.f32.mrf.mxu0
      %v1556 = vadd.f32 0.0, %v1555
      %1557 = vdwg.mxu0
      %1558 = vmatpush.msra.mxu0 %v1535
      %1559 = vmatpush.msra.mxu0 %v1531
      %1560 = vmatpush.msra.mxu0 %v1527
      %1561 = vmatpush.msra.mxu0 %v1523
      %1562 = vmatpush.msra.mxu0 %v1519
      %1563 = vmatpush.msra.mxu0 %v1515
      %1564 = vmatpush.msra.mxu0 %v1511
      %1565 = vmatpush.msra.mxu0 %v1507
      %1566 = vmatpush.msra.mxu0 %v1503
      %1567 = vmatpush.msra.mxu0 %v1499
      %1568 = vmatpush.msra.mxu0 %v1495
      %1569 = vmatpush.msra.mxu0 %v1491
      %1570 = vmatpush.msra.mxu0 %v1487
      %1571 = vmatpush.msra.mxu0 %v1483
      %1572 = vmatpush.msra.mxu0 %v1479
      %1573 = vmatpush.msra.mxu0 %v1475
      %1574 = vmatmul.f32.gmra.mxu0 %v1473
      %v1575 = vpop.f32.mrf.mxu0
      %v1576 = vadd.f32 0.0, %v1575
      %1577 = vdwg.mxu0
      %1578 = vmatpush.msra.mxu0 %v1536
      %1579 = vmatpush.msra.mxu0 %v1532
      %1580 = vmatpush.msra.mxu0 %v1528
      %1581 = vmatpush.msra.mxu0 %v1524
      %1582 = vmatpush.msra.mxu0 %v1520
      %1583 = vmatpush.msra.mxu0 %v1516
      %1584 = vmatpush.msra.mxu0 %v1512
      %1585 = vmatpush.msra.mxu0 %v1508
      %1586 = vmatpush.msra.mxu0 %v1504
      %1587 = vmatpush.msra.mxu0 %v1500
      %1588 = vmatpush.msra.mxu0 %v1496
      %1589 = vmatpush.msra.mxu0 %v1492
      %1590 = vmatpush.msra.mxu0 %v1488
      %1591 = vmatpush.msra.mxu0 %v1484
      %1592 = vmatpush.msra.mxu0 %v1480
      %1593 = vmatpush.msra.mxu0 %v1476
      %1594 = vmatmul.f32.gmra.mxu0 %v1473
      %v1595 = vpop.f32.mrf.mxu0
      %v1596 = vadd.f32 0.0, %v1595
      %1597 = vdwg.mxu0
      %1598 = vmatpush.msra.mxu0 %v1537
      %1599 = vmatpush.msra.mxu0 %v1533
      %1600 = vmatpush.msra.mxu0 %v1529
      %1601 = vmatpush.msra.mxu0 %v1525
      %1602 = vmatpush.msra.mxu0 %v1521
      %1603 = vmatpush.msra.mxu0 %v1517
      %1604 = vmatpush.msra.mxu0 %v1513
      %1605 = vmatpush.msra.mxu0 %v1509
      %1606 = vmatpush.msra.mxu0 %v1505
      %1607 = vmatpush.msra.mxu0 %v1501
      %1608 = vmatpush.msra.mxu0 %v1497
      %1609 = vmatpush.msra.mxu0 %v1493
      %1610 = vmatpush.msra.mxu0 %v1489
      %1611 = vmatpush.msra.mxu0 %v1485
      %1612 = vmatpush.msra.mxu0 %v1481
      %1613 = vmatpush.msra.mxu0 %v1477
      %1614 = vmatmul.f32.gmra.mxu0 %v1473
      %v1615 = vpop.f32.mrf.mxu0
      %v1616 = vadd.f32 0.0, %v1615
      %1617 = vdwg.mxu0
      %v1618 = vadd.f32 %v1469, %v1556
      %v1619 = vadd.f32 %v1470, %v1576
      %v1620 = vadd.f32 %v1471, %v1596
      %v1621 = vadd.f32 %v1472, %v1616
      %v1622 = vld [vmem:[#allocation6] sm:$0xff]
      %v1623 = vxor.u32 %v1618, 2147483648
      %v1624 = vmul.f32 %v1623, 1.442695
      %v1625 = vpow.pop %v1624
      %v1626 = vadd.f32 %v1625, 1.0
      %v1627 = vrcp.pop %v1626
      %v1628 = vmul.f32 %v1626, %v1627
      %v1629 = vsub.f32 1.0, %v1628
      %v1630 = vmul.f32 %v1627, %v1629
      %v1631 = vadd.f32 %v1627, %v1630
      %vm1632 = vweird.f32 %v1626
      %vm1633 = vweird.f32 %v1627
      %vm1634 = vmor %vm1632, %vm1633
      %v1635 = vsel %vm1634, %v1627, %v1631
      %v1636 = vand.u32 2147483647, %v1626
      %vm1637 = vcmp.eq.f32.partialorder %v1636, 8.507059e+37
      %v1638 = vand.u32 %v1626, 2147483648
      %v1639 = vor.u32 1.1754944e-38, %v1638
      %v1640 = vsel %vm1637, %v1639, %v1635
      %v1641 = vmul.f32 1.0, %v1640
      %v1642 = vxor.u32 %v1619, 2147483648
      %v1643 = vmul.f32 %v1642, 1.442695
      %v1644 = vpow.pop %v1643
      %v1645 = vadd.f32 %v1644, 1.0
      %v1646 = vrcp.pop %v1645
      %v1647 = vmul.f32 %v1645, %v1646
      %v1648 = vsub.f32 1.0, %v1647
      %v1649 = vmul.f32 %v1646, %v1648
      %v1650 = vadd.f32 %v1646, %v1649
      %vm1651 = vweird.f32 %v1645
      %vm1652 = vweird.f32 %v1646
      %vm1653 = vmor %vm1651, %vm1652
      %v1654 = vsel %vm1653, %v1646, %v1650
      %v1655 = vand.u32 2147483647, %v1645
      %vm1656 = vcmp.eq.f32.partialorder %v1655, 8.507059e+37
      %v1657 = vand.u32 %v1645, 2147483648
      %v1658 = vor.u32 1.1754944e-38, %v1657
      %v1659 = vsel %vm1656, %v1658, %v1654
      %v1660 = vmul.f32 1.0, %v1659
      %v1661 = vtanh.pop %v1620
      %v1662 = vxor.u32 %v1621, 2147483648
      %v1663 = vmul.f32 %v1662, 1.442695
      %v1664 = vpow.pop %v1663
      %v1665 = vadd.f32 %v1664, 1.0
      %v1666 = vrcp.pop %v1665
      %v1667 = vmul.f32 %v1665, %v1666
      %v1668 = vsub.f32 1.0, %v1667
      %v1669 = vmul.f32 %v1666, %v1668
      %v1670 = vadd.f32 %v1666, %v1669
      %vm1671 = vweird.f32 %v1665
      %vm1672 = vweird.f32 %v1666
      %vm1673 = vmor %vm1671, %vm1672
      %v1674 = vsel %vm1673, %v1666, %v1670
      %v1675 = vand.u32 2147483647, %v1665
      %vm1676 = vcmp.eq.f32.partialorder %v1675, 8.507059e+37
      %v1677 = vand.u32 %v1665, 2147483648
      %v1678 = vor.u32 1.1754944e-38, %v1677
      %v1679 = vsel %vm1676, %v1678, %v1674
      %v1680 = vmul.f32 1.0, %v1679
      %v1681 = vmul.f32 %v1660, %v1622
      %v1682 = vmul.f32 %v1641, %v1661
      %v1683 = vadd.f32 %v1681, %v1682
      %v1684 = vtanh.pop %v1683
      %v1685 = vmul.f32 %v1680, %v1684
      %1686 = vst [vmem:[#allocation5] sm:$0xff] %v1685
      %1687 = vst [vmem:[#allocation6] sm:$0xff] %v1683
      %v1688 = vld [vmem:[#allocation20] sm:$0xff]
      %v1689 = vld [vmem:[#allocation20 + $0x8] sm:$0xff]
      %v1690 = vld [vmem:[#allocation20 + $0x10] sm:$0xff]
      %v1691 = vld [vmem:[#allocation20 + $0x18] sm:$0xff]
      %v1692 = vld [vmem:[#allocation20 + $0x20] sm:$0xff]
      %v1693 = vld [vmem:[#allocation20 + $0x28] sm:$0xff]
      %v1694 = vld [vmem:[#allocation20 + $0x30] sm:$0xff]
      %v1695 = vld [vmem:[#allocation20 + $0x38] sm:$0xff]
      %v1696 = vld [vmem:[#allocation20 + $0x40] sm:$0xff]
      %v1697 = vld [vmem:[#allocation20 + $0x48] sm:$0xff]
      %v1698 = vld [vmem:[#allocation20 + $0x50] sm:$0xff]
      %v1699 = vld [vmem:[#allocation20 + $0x58] sm:$0xff]
      %v1700 = vld [vmem:[#allocation20 + $0x60] sm:$0xff]
      %v1701 = vld [vmem:[#allocation20 + $0x68] sm:$0xff]
      %v1702 = vld [vmem:[#allocation20 + $0x70] sm:$0xff]
      %v1703 = vld [vmem:[#allocation20 + $0x78] sm:$0xff]
      %v1704 = vld [vmem:[#allocation20 + $0x80] sm:$0xff]
      %v1705 = vld [vmem:[#allocation20 + $0x88] sm:$0xff]
      %v1706 = vld [vmem:[#allocation20 + $0x90] sm:$0xff]
      %v1707 = vld [vmem:[#allocation20 + $0x98] sm:$0xff]
      %v1708 = vld [vmem:[#allocation20 + $0xa0] sm:$0xff]
      %v1709 = vld [vmem:[#allocation20 + $0xa8] sm:$0xff]
      %v1710 = vld [vmem:[#allocation20 + $0xb0] sm:$0xff]
      %v1711 = vld [vmem:[#allocation20 + $0xb8] sm:$0xff]
      %v1712 = vld [vmem:[#allocation20 + $0xc0] sm:$0xff]
      %v1713 = vld [vmem:[#allocation20 + $0xc8] sm:$0xff]
      %v1714 = vld [vmem:[#allocation20 + $0xd0] sm:$0xff]
      %v1715 = vld [vmem:[#allocation20 + $0xd8] sm:$0xff]
      %v1716 = vld [vmem:[#allocation20 + $0xe0] sm:$0xff]
      %v1717 = vld [vmem:[#allocation20 + $0xe8] sm:$0xff]
      %v1718 = vld [vmem:[#allocation20 + $0xf0] sm:$0xff]
      %v1719 = vld [vmem:[#allocation20 + $0xf8] sm:$0xff]
      %v1720 = vld [vmem:[#allocation20 + $0x100] sm:$0xff]
      %v1721 = vld [vmem:[#allocation20 + $0x108] sm:$0xff]
      %v1722 = vld [vmem:[#allocation20 + $0x110] sm:$0xff]
      %v1723 = vld [vmem:[#allocation20 + $0x118] sm:$0xff]
      %v1724 = vld [vmem:[#allocation20 + $0x120] sm:$0xff]
      %v1725 = vld [vmem:[#allocation20 + $0x128] sm:$0xff]
      %v1726 = vld [vmem:[#allocation20 + $0x130] sm:$0xff]
      %v1727 = vld [vmem:[#allocation20 + $0x138] sm:$0xff]
      %v1728 = vld [vmem:[#allocation20 + $0x140] sm:$0xff]
      %v1729 = vld [vmem:[#allocation20 + $0x148] sm:$0xff]
      %v1730 = vld [vmem:[#allocation20 + $0x150] sm:$0xff]
      %v1731 = vld [vmem:[#allocation20 + $0x158] sm:$0xff]
      %v1732 = vld [vmem:[#allocation20 + $0x160] sm:$0xff]
      %v1733 = vld [vmem:[#allocation20 + $0x168] sm:$0xff]
      %v1734 = vld [vmem:[#allocation20 + $0x170] sm:$0xff]
      %v1735 = vld [vmem:[#allocation20 + $0x178] sm:$0xff]
      %v1736 = vld [vmem:[#allocation20 + $0x180] sm:$0xff]
      %v1737 = vld [vmem:[#allocation20 + $0x188] sm:$0xff]
      %v1738 = vld [vmem:[#allocation20 + $0x190] sm:$0xff]
      %v1739 = vld [vmem:[#allocation20 + $0x198] sm:$0xff]
      %v1740 = vld [vmem:[#allocation20 + $0x1a0] sm:$0xff]
      %v1741 = vld [vmem:[#allocation20 + $0x1a8] sm:$0xff]
      %v1742 = vld [vmem:[#allocation20 + $0x1b0] sm:$0xff]
      %v1743 = vld [vmem:[#allocation20 + $0x1b8] sm:$0xff]
      %v1744 = vld [vmem:[#allocation20 + $0x1c0] sm:$0xff]
      %v1745 = vld [vmem:[#allocation20 + $0x1c8] sm:$0xff]
      %v1746 = vld [vmem:[#allocation20 + $0x1d0] sm:$0xff]
      %v1747 = vld [vmem:[#allocation20 + $0x1d8] sm:$0xff]
      %v1748 = vld [vmem:[#allocation20 + $0x1e0] sm:$0xff]
      %v1749 = vld [vmem:[#allocation20 + $0x1e8] sm:$0xff]
      %v1750 = vld [vmem:[#allocation20 + $0x1f0] sm:$0xff]
      %v1751 = vld [vmem:[#allocation20 + $0x1f8] sm:$0xff]
      %v1752 = vld [vmem:[#allocation7] sm:$0xff]
      %v1753 = vld [vmem:[#allocation23] sm:$0xff]
      %v1754 = vld [vmem:[#allocation23 + $0x8] sm:$0xff]
      %v1755 = vld [vmem:[#allocation23 + $0x10] sm:$0xff]
      %v1756 = vld [vmem:[#allocation23 + $0x18] sm:$0xff]
      %v1757 = vld [vmem:[#allocation23 + $0x20] sm:$0xff]
      %v1758 = vld [vmem:[#allocation23 + $0x28] sm:$0xff]
      %v1759 = vld [vmem:[#allocation23 + $0x30] sm:$0xff]
      %v1760 = vld [vmem:[#allocation23 + $0x38] sm:$0xff]
      %v1761 = vld [vmem:[#allocation23 + $0x40] sm:$0xff]
      %v1762 = vld [vmem:[#allocation23 + $0x48] sm:$0xff]
      %v1763 = vld [vmem:[#allocation23 + $0x50] sm:$0xff]
      %v1764 = vld [vmem:[#allocation23 + $0x58] sm:$0xff]
      %v1765 = vld [vmem:[#allocation23 + $0x60] sm:$0xff]
      %v1766 = vld [vmem:[#allocation23 + $0x68] sm:$0xff]
      %v1767 = vld [vmem:[#allocation23 + $0x70] sm:$0xff]
      %v1768 = vld [vmem:[#allocation23 + $0x78] sm:$0xff]
      %v1769 = vld [vmem:[#allocation23 + $0x80] sm:$0xff]
      %v1770 = vld [vmem:[#allocation23 + $0x88] sm:$0xff]
      %v1771 = vld [vmem:[#allocation23 + $0x90] sm:$0xff]
      %v1772 = vld [vmem:[#allocation23 + $0x98] sm:$0xff]
      %v1773 = vld [vmem:[#allocation23 + $0xa0] sm:$0xff]
      %v1774 = vld [vmem:[#allocation23 + $0xa8] sm:$0xff]
      %v1775 = vld [vmem:[#allocation23 + $0xb0] sm:$0xff]
      %v1776 = vld [vmem:[#allocation23 + $0xb8] sm:$0xff]
      %v1777 = vld [vmem:[#allocation23 + $0xc0] sm:$0xff]
      %v1778 = vld [vmem:[#allocation23 + $0xc8] sm:$0xff]
      %v1779 = vld [vmem:[#allocation23 + $0xd0] sm:$0xff]
      %v1780 = vld [vmem:[#allocation23 + $0xd8] sm:$0xff]
      %v1781 = vld [vmem:[#allocation23 + $0xe0] sm:$0xff]
      %v1782 = vld [vmem:[#allocation23 + $0xe8] sm:$0xff]
      %v1783 = vld [vmem:[#allocation23 + $0xf0] sm:$0xff]
      %v1784 = vld [vmem:[#allocation23 + $0xf8] sm:$0xff]
      %v1785 = vld [vmem:[#allocation23 + $0x100] sm:$0xff]
      %v1786 = vld [vmem:[#allocation23 + $0x108] sm:$0xff]
      %v1787 = vld [vmem:[#allocation23 + $0x110] sm:$0xff]
      %v1788 = vld [vmem:[#allocation23 + $0x118] sm:$0xff]
      %v1789 = vld [vmem:[#allocation23 + $0x120] sm:$0xff]
      %v1790 = vld [vmem:[#allocation23 + $0x128] sm:$0xff]
      %v1791 = vld [vmem:[#allocation23 + $0x130] sm:$0xff]
      %v1792 = vld [vmem:[#allocation23 + $0x138] sm:$0xff]
      %v1793 = vld [vmem:[#allocation23 + $0x140] sm:$0xff]
      %v1794 = vld [vmem:[#allocation23 + $0x148] sm:$0xff]
      %v1795 = vld [vmem:[#allocation23 + $0x150] sm:$0xff]
      %v1796 = vld [vmem:[#allocation23 + $0x158] sm:$0xff]
      %v1797 = vld [vmem:[#allocation23 + $0x160] sm:$0xff]
      %v1798 = vld [vmem:[#allocation23 + $0x168] sm:$0xff]
      %v1799 = vld [vmem:[#allocation23 + $0x170] sm:$0xff]
      %v1800 = vld [vmem:[#allocation23 + $0x178] sm:$0xff]
      %v1801 = vld [vmem:[#allocation23 + $0x180] sm:$0xff]
      %v1802 = vld [vmem:[#allocation23 + $0x188] sm:$0xff]
      %v1803 = vld [vmem:[#allocation23 + $0x190] sm:$0xff]
      %v1804 = vld [vmem:[#allocation23 + $0x198] sm:$0xff]
      %v1805 = vld [vmem:[#allocation23 + $0x1a0] sm:$0xff]
      %v1806 = vld [vmem:[#allocation23 + $0x1a8] sm:$0xff]
      %v1807 = vld [vmem:[#allocation23 + $0x1b0] sm:$0xff]
      %v1808 = vld [vmem:[#allocation23 + $0x1b8] sm:$0xff]
      %v1809 = vld [vmem:[#allocation23 + $0x1c0] sm:$0xff]
      %v1810 = vld [vmem:[#allocation23 + $0x1c8] sm:$0xff]
      %v1811 = vld [vmem:[#allocation23 + $0x1d0] sm:$0xff]
      %v1812 = vld [vmem:[#allocation23 + $0x1d8] sm:$0xff]
      %v1813 = vld [vmem:[#allocation23 + $0x1e0] sm:$0xff]
      %v1814 = vld [vmem:[#allocation23 + $0x1e8] sm:$0xff]
      %v1815 = vld [vmem:[#allocation23 + $0x1f0] sm:$0xff]
      %v1816 = vld [vmem:[#allocation23 + $0x1f8] sm:$0xff]
      %1817 = vmatpush.msra.mxu0 %v1813
      %1818 = vmatpush.msra.mxu0 %v1809
      %1819 = vmatpush.msra.mxu0 %v1805
      %1820 = vmatpush.msra.mxu0 %v1801
      %1821 = vmatpush.msra.mxu0 %v1797
      %1822 = vmatpush.msra.mxu0 %v1793
      %1823 = vmatpush.msra.mxu0 %v1789
      %1824 = vmatpush.msra.mxu0 %v1785
      %1825 = vmatpush.msra.mxu0 %v1781
      %1826 = vmatpush.msra.mxu0 %v1777
      %1827 = vmatpush.msra.mxu0 %v1773
      %1828 = vmatpush.msra.mxu0 %v1769
      %1829 = vmatpush.msra.mxu0 %v1765
      %1830 = vmatpush.msra.mxu0 %v1761
      %1831 = vmatpush.msra.mxu0 %v1757
      %1832 = vmatpush.msra.mxu0 %v1753
      %1833 = vmatmul.f32.gmra.mxu0 %v1752
      %v1834 = vpop.f32.mrf.mxu0
      %v1835 = vadd.f32 0.0, %v1834
      %1836 = vdwg.mxu0
      %1837 = vmatpush.msra.mxu0 %v1814
      %1838 = vmatpush.msra.mxu0 %v1810
      %1839 = vmatpush.msra.mxu0 %v1806
      %1840 = vmatpush.msra.mxu0 %v1802
      %1841 = vmatpush.msra.mxu0 %v1798
      %1842 = vmatpush.msra.mxu0 %v1794
      %1843 = vmatpush.msra.mxu0 %v1790
      %1844 = vmatpush.msra.mxu0 %v1786
      %1845 = vmatpush.msra.mxu0 %v1782
      %1846 = vmatpush.msra.mxu0 %v1778
      %1847 = vmatpush.msra.mxu0 %v1774
      %1848 = vmatpush.msra.mxu0 %v1770
      %1849 = vmatpush.msra.mxu0 %v1766
      %1850 = vmatpush.msra.mxu0 %v1762
      %1851 = vmatpush.msra.mxu0 %v1758
      %1852 = vmatpush.msra.mxu0 %v1754
      %1853 = vmatmul.f32.gmra.mxu0 %v1752
      %v1854 = vpop.f32.mrf.mxu0
      %v1855 = vadd.f32 0.0, %v1854
      %1856 = vdwg.mxu0
      %1857 = vmatpush.msra.mxu0 %v1815
      %1858 = vmatpush.msra.mxu0 %v1811
      %1859 = vmatpush.msra.mxu0 %v1807
      %1860 = vmatpush.msra.mxu0 %v1803
      %1861 = vmatpush.msra.mxu0 %v1799
      %1862 = vmatpush.msra.mxu0 %v1795
      %1863 = vmatpush.msra.mxu0 %v1791
      %1864 = vmatpush.msra.mxu0 %v1787
      %1865 = vmatpush.msra.mxu0 %v1783
      %1866 = vmatpush.msra.mxu0 %v1779
      %1867 = vmatpush.msra.mxu0 %v1775
      %1868 = vmatpush.msra.mxu0 %v1771
      %1869 = vmatpush.msra.mxu0 %v1767
      %1870 = vmatpush.msra.mxu0 %v1763
      %1871 = vmatpush.msra.mxu0 %v1759
      %1872 = vmatpush.msra.mxu0 %v1755
      %1873 = vmatmul.f32.gmra.mxu0 %v1752
      %v1874 = vpop.f32.mrf.mxu0
      %v1875 = vadd.f32 0.0, %v1874
      %1876 = vdwg.mxu0
      %1877 = vmatpush.msra.mxu0 %v1816
      %1878 = vmatpush.msra.mxu0 %v1812
      %1879 = vmatpush.msra.mxu0 %v1808
      %1880 = vmatpush.msra.mxu0 %v1804
      %1881 = vmatpush.msra.mxu0 %v1800
      %1882 = vmatpush.msra.mxu0 %v1796
      %1883 = vmatpush.msra.mxu0 %v1792
      %1884 = vmatpush.msra.mxu0 %v1788
      %1885 = vmatpush.msra.mxu0 %v1784
      %1886 = vmatpush.msra.mxu0 %v1780
      %1887 = vmatpush.msra.mxu0 %v1776
      %1888 = vmatpush.msra.mxu0 %v1772
      %1889 = vmatpush.msra.mxu0 %v1768
      %1890 = vmatpush.msra.mxu0 %v1764
      %1891 = vmatpush.msra.mxu0 %v1760
      %1892 = vmatpush.msra.mxu0 %v1756
      %1893 = vmatmul.f32.gmra.mxu0 %v1752
      %v1894 = vpop.f32.mrf.mxu0
      %v1895 = vadd.f32 0.0, %v1894
      %1896 = vdwg.mxu0
      %1897 = vmatpush.msra.mxu0 %v1748
      %1898 = vmatpush.msra.mxu0 %v1744
      %1899 = vmatpush.msra.mxu0 %v1740
      %1900 = vmatpush.msra.mxu0 %v1736
      %1901 = vmatpush.msra.mxu0 %v1732
      %1902 = vmatpush.msra.mxu0 %v1728
      %1903 = vmatpush.msra.mxu0 %v1724
      %1904 = vmatpush.msra.mxu0 %v1720
      %1905 = vmatpush.msra.mxu0 %v1716
      %1906 = vmatpush.msra.mxu0 %v1712
      %1907 = vmatpush.msra.mxu0 %v1708
      %1908 = vmatpush.msra.mxu0 %v1704
      %1909 = vmatpush.msra.mxu0 %v1700
      %1910 = vmatpush.msra.mxu0 %v1696
      %1911 = vmatpush.msra.mxu0 %v1692
      %1912 = vmatpush.msra.mxu0 %v1688
      %1913 = vmatmul.f32.gmra.mxu0 %v1685
      %v1914 = vpop.f32.mrf.mxu0
      %v1915 = vadd.f32 %v1835, %v1914
      %1916 = vdwg.mxu0
      %1917 = vmatpush.msra.mxu0 %v1749
      %1918 = vmatpush.msra.mxu0 %v1745
      %1919 = vmatpush.msra.mxu0 %v1741
      %1920 = vmatpush.msra.mxu0 %v1737
      %1921 = vmatpush.msra.mxu0 %v1733
      %1922 = vmatpush.msra.mxu0 %v1729
      %1923 = vmatpush.msra.mxu0 %v1725
      %1924 = vmatpush.msra.mxu0 %v1721
      %1925 = vmatpush.msra.mxu0 %v1717
      %1926 = vmatpush.msra.mxu0 %v1713
      %1927 = vmatpush.msra.mxu0 %v1709
      %1928 = vmatpush.msra.mxu0 %v1705
      %1929 = vmatpush.msra.mxu0 %v1701
      %1930 = vmatpush.msra.mxu0 %v1697
      %1931 = vmatpush.msra.mxu0 %v1693
      %1932 = vmatpush.msra.mxu0 %v1689
      %1933 = vmatmul.f32.gmra.mxu0 %v1685
      %v1934 = vpop.f32.mrf.mxu0
      %v1935 = vadd.f32 %v1855, %v1934
      %1936 = vdwg.mxu0
      %1937 = vmatpush.msra.mxu0 %v1750
      %1938 = vmatpush.msra.mxu0 %v1746
      %1939 = vmatpush.msra.mxu0 %v1742
      %1940 = vmatpush.msra.mxu0 %v1738
      %1941 = vmatpush.msra.mxu0 %v1734
      %1942 = vmatpush.msra.mxu0 %v1730
      %1943 = vmatpush.msra.mxu0 %v1726
      %1944 = vmatpush.msra.mxu0 %v1722
      %1945 = vmatpush.msra.mxu0 %v1718
      %1946 = vmatpush.msra.mxu0 %v1714
      %1947 = vmatpush.msra.mxu0 %v1710
      %1948 = vmatpush.msra.mxu0 %v1706
      %1949 = vmatpush.msra.mxu0 %v1702
      %1950 = vmatpush.msra.mxu0 %v1698
      %1951 = vmatpush.msra.mxu0 %v1694
      %1952 = vmatpush.msra.mxu0 %v1690
      %1953 = vmatmul.f32.gmra.mxu0 %v1685
      %v1954 = vpop.f32.mrf.mxu0
      %v1955 = vadd.f32 %v1875, %v1954
      %1956 = vdwg.mxu0
      %1957 = vmatpush.msra.mxu0 %v1751
      %1958 = vmatpush.msra.mxu0 %v1747
      %1959 = vmatpush.msra.mxu0 %v1743
      %1960 = vmatpush.msra.mxu0 %v1739
      %1961 = vmatpush.msra.mxu0 %v1735
      %1962 = vmatpush.msra.mxu0 %v1731
      %1963 = vmatpush.msra.mxu0 %v1727
      %1964 = vmatpush.msra.mxu0 %v1723
      %1965 = vmatpush.msra.mxu0 %v1719
      %1966 = vmatpush.msra.mxu0 %v1715
      %1967 = vmatpush.msra.mxu0 %v1711
      %1968 = vmatpush.msra.mxu0 %v1707
      %1969 = vmatpush.msra.mxu0 %v1703
      %1970 = vmatpush.msra.mxu0 %v1699
      %1971 = vmatpush.msra.mxu0 %v1695
      %1972 = vmatpush.msra.mxu0 %v1691
      %1973 = vmatmul.f32.gmra.mxu0 %v1685
      %v1974 = vpop.f32.mrf.mxu0
      %v1975 = vadd.f32 %v1895, %v1974
      %1976 = vdwg.mxu0
      %v1977 = vadd.f32 %v1915, %v849
      %v1978 = vadd.f32 %v1935, %v850
      %v1979 = vadd.f32 %v1955, %v851
      %v1980 = vadd.f32 %v1975, %v852
      %v1981 = vadd.f32 %v1977, %v1462
      %v1982 = vadd.f32 %v1978, %v1463
      %v1983 = vadd.f32 %v1979, %v1464
      %v1984 = vadd.f32 %v1980, %v1465
      %v1985 = vld [vmem:[#allocation8] sm:$0xff]
      %v1986 = vxor.u32 %v1981, 2147483648
      %v1987 = vmul.f32 %v1986, 1.442695
      %v1988 = vpow.pop %v1987
      %v1989 = vadd.f32 %v1988, 1.0
      %v1990 = vrcp.pop %v1989
      %v1991 = vmul.f32 %v1989, %v1990
      %v1992 = vsub.f32 1.0, %v1991
      %v1993 = vmul.f32 %v1990, %v1992
      %v1994 = vadd.f32 %v1990, %v1993
      %vm1995 = vweird.f32 %v1989
      %vm1996 = vweird.f32 %v1990
      %vm1997 = vmor %vm1995, %vm1996
      %v1998 = vsel %vm1997, %v1990, %v1994
      %v1999 = vand.u32 2147483647, %v1989
      %vm2000 = vcmp.eq.f32.partialorder %v1999, 8.507059e+37
      %v2001 = vand.u32 %v1989, 2147483648
      %v2002 = vor.u32 1.1754944e-38, %v2001
      %v2003 = vsel %vm2000, %v2002, %v1998
      %v2004 = vmul.f32 1.0, %v2003
      %v2005 = vxor.u32 %v1982, 2147483648
      %v2006 = vmul.f32 %v2005, 1.442695
      %v2007 = vpow.pop %v2006
      %v2008 = vadd.f32 %v2007, 1.0
      %v2009 = vrcp.pop %v2008
      %v2010 = vmul.f32 %v2008, %v2009
      %v2011 = vsub.f32 1.0, %v2010
      %v2012 = vmul.f32 %v2009, %v2011
      %v2013 = vadd.f32 %v2009, %v2012
      %vm2014 = vweird.f32 %v2008
      %vm2015 = vweird.f32 %v2009
      %vm2016 = vmor %vm2014, %vm2015
      %v2017 = vsel %vm2016, %v2009, %v2013
      %v2018 = vand.u32 2147483647, %v2008
      %vm2019 = vcmp.eq.f32.partialorder %v2018, 8.507059e+37
      %v2020 = vand.u32 %v2008, 2147483648
      %v2021 = vor.u32 1.1754944e-38, %v2020
      %v2022 = vsel %vm2019, %v2021, %v2017
      %v2023 = vmul.f32 1.0, %v2022
      %v2024 = vtanh.pop %v1983
      %v2025 = vxor.u32 %v1984, 2147483648
      %v2026 = vmul.f32 %v2025, 1.442695
      %v2027 = vpow.pop %v2026
      %v2028 = vadd.f32 %v2027, 1.0
      %v2029 = vrcp.pop %v2028
      %v2030 = vmul.f32 %v2028, %v2029
      %v2031 = vsub.f32 1.0, %v2030
      %v2032 = vmul.f32 %v2029, %v2031
      %v2033 = vadd.f32 %v2029, %v2032
      %vm2034 = vweird.f32 %v2028
      %vm2035 = vweird.f32 %v2029
      %vm2036 = vmor %vm2034, %vm2035
      %v2037 = vsel %vm2036, %v2029, %v2033
      %v2038 = vand.u32 2147483647, %v2028
      %vm2039 = vcmp.eq.f32.partialorder %v2038, 8.507059e+37
      %v2040 = vand.u32 %v2028, 2147483648
      %v2041 = vor.u32 1.1754944e-38, %v2040
      %v2042 = vsel %vm2039, %v2041, %v2037
      %v2043 = vmul.f32 1.0, %v2042
      %v2044 = vmul.f32 %v2023, %v1985
      %v2045 = vmul.f32 %v2004, %v2024
      %v2046 = vadd.f32 %v2044, %v2045
      %v2047 = vtanh.pop %v2046
      %v2048 = vmul.f32 %v2043, %v2047
      %2049 = vst [vmem:[#allocation7] sm:$0xff] %v2048
      %2050 = vst [vmem:[#allocation8] sm:$0xff] %v2046
      %s2051 = smul.u32 %s1453, 8
      %s2052 = scalar_lea.vmem [#allocation4], %s2051
      %2053 = vst [vmem:[%s2052] sm:$0xff] %v2048
    $region105: #{tpu_custom_call.1} parent=1 // loop_footer
      %s1457 = sadd.s32 1, %s1453
    $region106: #{tpu_custom_call.1} parent=1 // loop_footer_branch
      %1452 = sbr.rel target = $region102
    $region107: #{tpu_custom_call.1} parent=1 // loop_exit
      _
    %v2054 = vld [vmem:[#allocation4] sm:$0xff]
    %v2055 = vld [vmem:[#allocation4 + $0x8] sm:$0xff]
    %v2056 = vld [vmem:[#allocation4 + $0x10] sm:$0xff]
    %v2057 = vld [vmem:[#allocation4 + $0x18] sm:$0xff]
    %v2058 = vld [vmem:[#allocation24] sm:$0xff]
    %v2059 = vld [vmem:[#allocation24 + $0x8] sm:$0xff]
    %v2060 = vld [vmem:[#allocation24 + $0x10] sm:$0xff]
    %v2061 = vld [vmem:[#allocation24 + $0x18] sm:$0xff]
    %v2062 = vld [vmem:[#allocation24 + $0x20] sm:$0xff]
    %v2063 = vld [vmem:[#allocation24 + $0x28] sm:$0xff]
    %v2064 = vld [vmem:[#allocation24 + $0x30] sm:$0xff]
    %v2065 = vld [vmem:[#allocation24 + $0x38] sm:$0xff]
    %v2066 = vld [vmem:[#allocation24 + $0x40] sm:$0xff]
    %v2067 = vld [vmem:[#allocation24 + $0x48] sm:$0xff]
    %v2068 = vld [vmem:[#allocation24 + $0x50] sm:$0xff]
    %v2069 = vld [vmem:[#allocation24 + $0x58] sm:$0xff]
    %v2070 = vld [vmem:[#allocation24 + $0x60] sm:$0xff]
    %v2071 = vld [vmem:[#allocation24 + $0x68] sm:$0xff]
    %v2072 = vld [vmem:[#allocation24 + $0x70] sm:$0xff]
    %v2073 = vld [vmem:[#allocation24 + $0x78] sm:$0xff]
    %v2074 = vld [vmem:[%s12] sm:$0x1]
    %v2076 = vperm.slane %v2074, 0
    %2078 = vmatpush.msra.mxu0 %v2073
    %2079 = vmatpush.msra.mxu0 %v2072
    %2080 = vmatpush.msra.mxu0 %v2071
    %2081 = vmatpush.msra.mxu0 %v2070
    %2082 = vmatpush.msra.mxu0 %v2069
    %2083 = vmatpush.msra.mxu0 %v2068
    %2084 = vmatpush.msra.mxu0 %v2067
    %2085 = vmatpush.msra.mxu0 %v2066
    %2086 = vmatpush.msra.mxu0 %v2065
    %2087 = vmatpush.msra.mxu0 %v2064
    %2088 = vmatpush.msra.mxu0 %v2063
    %2089 = vmatpush.msra.mxu0 %v2062
    %2090 = vmatpush.msra.mxu0 %v2061
    %2091 = vmatpush.msra.mxu0 %v2060
    %2092 = vmatpush.msra.mxu0 %v2059
    %2093 = vmatpush.msra.mxu0 %v2058
    %2094 = vmatmul.f32.gmra.mxu0 %v2054
    %v2095 = vpop.f32.mrf.mxu0
    %v2096 = vadd.f32 %v2076, %v2095
    %2097 = vmatmul.f32.gmra.mxu0 %v2055
    %v2098 = vpop.f32.mrf.mxu0
    %v2099 = vadd.f32 %v2076, %v2098
    %2100 = vmatmul.f32.gmra.mxu0 %v2056
    %v2101 = vpop.f32.mrf.mxu0
    %v2102 = vadd.f32 %v2076, %v2101
    %2103 = vmatmul.f32.gmra.mxu0 %v2057
    %v2104 = vpop.f32.mrf.mxu0
    %v2105 = vadd.f32 %v2076, %v2104
    %2106 = vdwg.mxu0
    %2107 = vst [vmem:[#allocation26] sm:$0xff] %v2096
    %2108 = vst [vmem:[#allocation26 + $0x8] sm:$0xff] %v2099
    %2109 = vst [vmem:[#allocation26 + $0x10] sm:$0xff] %v2102
    %2110 = vst [vmem:[#allocation26 + $0x18] sm:$0xff] %v2105
    // Predicated region
    $region108: #{tpu_custom_call.1} parent=1 // pred_check
      _
    $region109: #{tpu_custom_call.1} parent=1 // pred_check_branch
      %2112 = sbr.rel (0) target = $region111
    $region110: #{tpu_custom_call.1} parent=1 // pred_region
      %2114 = vsyncadd [#allocation11], 0
      %s2115 = sshll.u32 [#allocation26], 4
      %s2116 = int_to_ptr.vmem [resolvable:$true] %s2115
      %s2117 = sshll.u32 %s13, 4
      %s2118 = int_to_ptr.hbm [resolvable:$true] %s2117
      %2123 = dma.vmem_to_hbm [thread:$0]  %s2116, 512, %s2118, [#allocation11], 128, 128, 8
    $region111: #{tpu_custom_call.1} parent=1 // pred_fallthru
      _
    // Predicated region
    $region112: #{tpu_custom_call.1} parent=1 // pred_check
      _
    $region113: #{tpu_custom_call.1} parent=1 // pred_check_branch
      %2125 = sbr.rel (0) target = $region115
    $region114: #{tpu_custom_call.1} parent=1 // pred_region
      %2127 = dma.done [#allocation11], 512
    $region115: #{tpu_custom_call.1} parent=1 // pred_fallthru
      _
    %2128 = vsyncpa [#allocation10], 1
    %2129 = vsyncpa [#allocation13], 1
    %2130 = vsyncpa [#allocation16], 1
    %2131 = vsyncpa [#allocation19], 1
    %2132 = vsyncpa [#allocation22], 1
    %2133 = vsyncpa [#allocation25], 1
    %2134 = vsyncpa [#allocation11], 1

</llo_original>
